<compile_context>
chip_gen: v7x
topology: tpu7x:2x2x1
jax: 0.10.0
libtpu: 0.0.40
codegen_flags: <defaults>
</compile_context>

<pallas_src>
import jax
import jax.numpy as jnp
from jax.experimental import pallas as pl
from jax.experimental.pallas import tpu as pltpu


def _round_up(x, m):
    return ((x + m - 1) // m) * m


# ----------------------------------------------------------------------------
# Kernel 1: the recurrence.  grid = (direction, time); state in VMEM scratch.
# Emits h1 (B, D) per (direction, time); the fc projection is hoisted out.
# ----------------------------------------------------------------------------
def _recurrent_kernel(emb_ref, img_ref,
                      w_ih1_ref, w_hh1_ref, b1_ref,
                      w_lin_ref, b_lin_ref,
                      w_ih2_ref, w_hh2_ref, b2_ref,
                      h1_out_ref,
                      h_sc, c_sc, h1_sc, c1_sc):
    t = pl.program_id(1)
    D = h_sc.shape[-1]

    @pl.when(t == 0)
    def _():
        h_sc[...] = jnp.zeros_like(h_sc)
        c_sc[...] = jnp.zeros_like(c_sc)
        h1_sc[...] = jnp.zeros_like(h1_sc)
        c1_sc[...] = jnp.zeros_like(c1_sc)

    def dot(a, b):
        return jnp.dot(a, b, preferred_element_type=jnp.float32)

    def lstm(gates, c_prev):
        # fused gates (B, 4D), PyTorch gate order i, f, g, o
        i = jax.nn.sigmoid(gates[:, 0 * D:1 * D])
        f = jax.nn.sigmoid(gates[:, 1 * D:2 * D])
        g = jnp.tanh(gates[:, 2 * D:3 * D])
        o = jax.nn.sigmoid(gates[:, 3 * D:4 * D])
        c_new = f * c_prev + i * g
        return o * jnp.tanh(c_new), c_new

    x = emb_ref[0, 0]      # (B, E)  token embedding at step t (this direction)
    img = img_ref[0]       # (B, D)  img_forward / img_backward features

    # ---- LSTMCell #1 (decode_step1 / decode_step_reverse1): 2 fused matmuls
    gates1 = dot(x, w_ih1_ref[0]) + dot(h_sc[...], w_hh1_ref[0]) + b1_ref[0]
    h_new, c_new = lstm(gates1, c_sc[...])
    h_sc[...] = h_new
    c_sc[...] = c_new

    # ---- linear_f / linear_r
    ha = dot(h_new, w_lin_ref[0]) + b_lin_ref[0]

    # ---- LSTMCell #2 on cat([h, ha, img]): 3 split-K + 1 hidden fused matmuls
    gates2 = (dot(h_new, w_ih2_ref[0, 0]) + dot(ha, w_ih2_ref[0, 1])
              + dot(img, w_ih2_ref[0, 2]) + dot(h1_sc[...], w_hh2_ref[0])
              + b2_ref[0])
    h1_new, c1_new = lstm(gates2, c1_sc[...])
    h1_sc[...] = h1_new
    c1_sc[...] = c1_new

    h1_out_ref[0, 0] = h1_new


def _run_recurrent(emb, img, W):
    """emb: (2, T_dec, B, E); img: (2, B, D); W: direction-stacked weights."""
    n_dir, T_dec, B, E = emb.shape
    D = img.shape[-1]

    def wspec(arr):
        nd = arr.ndim
        return pl.BlockSpec((1,) + tuple(arr.shape[1:]),
                            lambda d, t, _n=nd: (d,) + (0,) * (_n - 1))

    grid_spec = pltpu.PrefetchScalarGridSpec(
        num_scalar_prefetch=0,
        grid=(n_dir, T_dec),
        in_specs=[
            pl.BlockSpec((1, 1, B, E), lambda d, t: (d, t, 0, 0)),  # embeddings
            wspec(img),                                             # img feats
            wspec(W['w_ih1']), wspec(W['w_hh1']), wspec(W['b1']),   # LSTM cell 1
            wspec(W['w_lin']), wspec(W['b_lin']),                   # linear_f/_r
            wspec(W['w_ih2']), wspec(W['w_hh2']), wspec(W['b2']),   # LSTM cell 2
        ],
        out_specs=pl.BlockSpec((1, 1, B, D), lambda d, t: (d, t, 0, 0)),
        scratch_shapes=[pltpu.VMEM((B, D), jnp.float32) for _ in range(4)],
    )
    return pl.pallas_call(
        _recurrent_kernel,
        out_shape=jax.ShapeDtypeStruct((n_dir, T_dec, B, D), jnp.float32),
        grid_spec=grid_spec,
        compiler_params=pltpu.CompilerParams(
            dimension_semantics=("parallel", "arbitrary")),
    )(emb, img,
      W['w_ih1'], W['w_hh1'], W['b1'],
      W['w_lin'], W['b_lin'],
      W['w_ih2'], W['w_hh2'], W['b2'])


# ----------------------------------------------------------------------------
# Kernel 2: hoisted fc.  One batched (rows, D) @ (D, V_pad) matmul, lane-dense.
# ----------------------------------------------------------------------------
def _fc_kernel(h_ref, w_ref, b_ref, o_ref):
    o_ref[...] = (jnp.dot(h_ref[...], w_ref[...],
                          preferred_element_type=jnp.float32) + b_ref[...])


def _run_fc(h_rows, w_fc, b_fc, tm):
    R_pad, D = h_rows.shape
    V_pad = w_fc.shape[-1]
    grid_spec = pltpu.PrefetchScalarGridSpec(
        num_scalar_prefetch=0,
        grid=(R_pad // tm,),
        in_specs=[
            pl.BlockSpec((tm, D), lambda r: (r, 0)),
            pl.BlockSpec((D, V_pad), lambda r: (0, 0)),
            pl.BlockSpec((1, V_pad), lambda r: (0, 0)),
        ],
        out_specs=pl.BlockSpec((tm, V_pad), lambda r: (r, 0)),
    )
    return pl.pallas_call(
        _fc_kernel,
        out_shape=jax.ShapeDtypeStruct((R_pad, V_pad), jnp.float32),
        grid_spec=grid_spec,
        compiler_params=pltpu.CompilerParams(
            dimension_semantics=("parallel",)),
    )(h_rows, w_fc, b_fc)


# ----------------------------------------------------------------------------
# Parameters (deterministic, in-script init — shapes follow the nn.Module)
# ----------------------------------------------------------------------------
def init_params(key, E, D, V, enc_dim):
    V_pad = _round_up(V, 128)
    ks = jax.random.split(key, 24)
    u = lambda k, shape: jax.random.uniform(k, shape, jnp.float32, -0.1, 0.1)

    shared = {
        'emb': u(ks[0], (V, E)),
        'emb_rev': u(ks[1], (V, E)),
        'w_imgf': u(ks[2], (enc_dim, D)), 'b_imgf': u(ks[3], (1, D)),
        'w_imgr': u(ks[4], (enc_dim, D)), 'b_imgr': u(ks[5], (1, D)),
    }

    def direction(k0):
        # gate-fused LSTM weights, gate order i, f, g, o along the 4D axis
        return {
            'w_ih1': u(ks[k0 + 0], (E, 4 * D)),
            'w_hh1': u(ks[k0 + 1], (D, 4 * D)),
            'b1':    u(ks[k0 + 2], (1, 4 * D)),      # b_ih + b_hh combined
            'w_lin': u(ks[k0 + 3], (D, D)),
            'b_lin': u(ks[k0 + 4], (1, D)),
            'w_ih2': u(ks[k0 + 5], (3, D, 4 * D)),   # split for cat([h, ha, img])
            'w_hh2': u(ks[k0 + 6], (D, 4 * D)),
            'b2':    u(ks[k0 + 7], (1, 4 * D)),
        }

    fwd, rev = direction(6), direction(14)
    fused = {k: jnp.stack([fwd[k], rev[k]], axis=0) for k in fwd}

    # shared fc (the PyTorch forward uses self.fc for both directions)
    w_fc = jnp.pad(u(ks[22], (D, V)), ((0, 0), (0, V_pad - V)))
    b_fc = jnp.zeros((1, V_pad), jnp.float32)
    fc_params = {'w_fc': w_fc, 'b_fc': b_fc, 'vocab_size': V}
    return shared, fused, fc_params


# ----------------------------------------------------------------------------
# Full forward (glue in plain JAX; hot paths in the two Pallas kernels)
# ----------------------------------------------------------------------------
def decoder_forward(encoder_out, encoded_captions, caption_lengths,
                    shared, fused, fc_params):
    B = encoder_out.shape[0]
    enc_dim = encoder_out.shape[-1]
    encoder_out = encoder_out.reshape(B, enc_dim)

    lens = caption_lengths.squeeze(1)
    sort_ind = jnp.argsort(-lens)            # descending
    lens_s = lens[sort_ind]
    enc_s = encoder_out[sort_ind]
    caps_s = encoded_captions[sort_ind]

    # reversed captions: each row reversed over its own length, zeros elsewhere
    T = caps_s.shape[1]
    pos = jnp.arange(T)[None, :]
    rev_idx = lens_s[:, None] - 1 - pos
    caps_rev = jnp.where(
        rev_idx >= 0,
        jnp.take_along_axis(caps_s, jnp.clip(rev_idx, 0, T - 1), axis=1),
        0)

    decode_lengths = lens_s - 1
    T_dec = T - 1      # static max decode length -> Pallas kernels compile once

    emb_f = shared['emb'][caps_s[:, :T_dec]]          # (B, T_dec, E)
    emb_r = shared['emb_rev'][caps_rev[:, :T_dec]]
    img_f = enc_s @ shared['w_imgf'] + shared['b_imgf']
    img_r = enc_s @ shared['w_imgr'] + shared['b_imgr']

    # stack directions, go time-major: (2, T_dec, B, E) / (2, B, D)
    emb_2 = jnp.stack([jnp.transpose(emb_f, (1, 0, 2)),
                       jnp.transpose(emb_r, (1, 0, 2))], axis=0)
    img_2 = jnp.stack([img_f, img_r], axis=0)

    D = img_2.shape[-1]
    h1_all = _run_recurrent(emb_2, img_2, fused)      # (2, T_dec, B, D)

    # hoisted fc over all (direction, time, batch) rows in one batched matmul
    R = 2 * T_dec * B
    tm = min(256, _round_up(R, 8))
    R_pad = _round_up(R, tm)
    h1_rows = h1_all.reshape(R, D)
    if R_pad != R:
        h1_rows = jnp.pad(h1_rows, ((0, R_pad - R), (0, 0)))
    preds_rows = _run_fc(h1_rows, fc_params['w_fc'], fc_params['b_fc'], tm)

    V = fc_params['vocab_size']
    preds = preds_rows[:R, :V].reshape(2, T_dec, B, V)

    # validity mask: predictions[b, t] is only ever written while t < len_b - 1
    mask = (jnp.arange(T_dec)[None, :, None, None]
            < decode_lengths[None, None, :, None]).astype(preds.dtype)
    preds = preds * mask

    predictions = jnp.transpose(preds[0], (1, 0, 2))            # (B, T_dec, V)
    predictions_reverse = jnp.transpose(preds[1], (1, 0, 2))

    # match the PyTorch output time extent = max(decode_lengths)
    T_out = int(jnp.max(decode_lengths))
    predictions = predictions[:, :T_out]
    predictions_reverse = predictions_reverse[:, :T_out]

    return ([predictions, predictions_reverse],
            [caps_s, caps_rev],
            decode_lengths,
            sort_ind)


# ----------------------------------------------------------------------------
# Pure-JAX reference of one direction (correctness check)
# ----------------------------------------------------------------------------
def _ref_direction(emb_tbe, img, W, d, w_fc, b_fc):
    T_dec, B, _ = emb_tbe.shape
    D = img.shape[1]

    def lstm(gates, c_prev):
        i = jax.nn.sigmoid(gates[:, :D])
        f = jax.nn.sigmoid(gates[:, D:2 * D])
        g = jnp.tanh(gates[:, 2 * D:3 * D])
        o = jax.nn.sigmoid(gates[:, 3 * D:])
        c_new = f * c_prev + i * g
        return o * jnp.tanh(c_new), c_new

    h = c = h1 = c1 = jnp.zeros((B, D), jnp.float32)
    outs = []
    for t in range(T_dec):
        h, c = lstm(emb_tbe[t] @ W['w_ih1'][d] + h @ W['w_hh1'][d] + W['b1'][d], c)
        ha = h @ W['w_lin'][d] + W['b_lin'][d]
        gates2 = (h @ W['w_ih2'][d, 0] + ha @ W['w_ih2'][d, 1]
                  + img @ W['w_ih2'][d, 2] + h1 @ W['w_hh2'][d] + W['b2'][d])
        h1, c1 = lstm(gates2, c1)
        outs.append(h1 @ w_fc + b_fc)
    return jnp.stack(outs, 0)        # (T_dec, B, V_pad)


if __name__ == "__main__":
    # Small shapes consistent with the module's forward
    B, T, E, D, V, ENC = 4, 8, 32, 32, 64, 64

    key = jax.random.PRNGKey(0)
    k_par, k_enc, k_cap = jax.random.split(key, 3)

    shared, fused, fc_params = init_params(k_par, E, D, V, ENC)

    encoder_out = jax.random.normal(k_enc, (B, ENC), jnp.float32)
    encoded_captions = jax.random.randint(k_cap, (B, T), 1, V, jnp.int32)
    caption_lengths = jnp.array([[8], [5], [7], [4]], jnp.int32)

    (preds, caps_out, decode_lengths, sort_ind) = decoder_forward(
        encoder_out, encoded_captions, caption_lengths,
        shared, fused, fc_params)
    predictions, predictions_reverse = preds
    jax.block_until_ready(predictions)
    jax.block_until_ready(predictions_reverse)

    # ---- correctness check against the pure-JAX reference ----
    lens_s = caption_lengths.squeeze(1)[sort_ind]
    T_dec = T - 1
    T_out = int(jnp.max(lens_s) - 1)
    enc_s = encoder_out[sort_ind]
    img_f = enc_s @ shared['w_imgf'] + shared['b_imgf']
    img_r = enc_s @ shared['w_imgr'] + shared['b_imgr']
    emb_f = jnp.transpose(shared['emb'][caps_out[0][:, :T_dec]], (1, 0, 2))
    emb_r = jnp.transpose(shared['emb_rev'][caps_out[1][:, :T_dec]], (1, 0, 2))
    mask = (jnp.arange(T_dec)[:, None, None]
            < (lens_s - 1)[None, :, None]).astype(jnp.float32)

    ref_f = _ref_direction(emb_f, img_f, fused, 0,
                           fc_params['w_fc'], fc_params['b_fc'])[:, :, :V] * mask
    ref_r = _ref_direction(emb_r, img_r, fused, 1,
                           fc_params['w_fc'], fc_params['b_fc'])[:, :, :V] * mask
    ref_f = jnp.transpose(ref_f, (1, 0, 2))[:, :T_out]
    ref_r = jnp.transpose(ref_r, (1, 0, 2))[:, :T_out]

    assert predictions.shape == (B, T_out, V)
    assert predictions_reverse.shape == (B, T_out, V)
    assert jnp.allclose(predictions, ref_f, rtol=1e-3, atol=1e-3)
    assert jnp.allclose(predictions_reverse, ref_r, rtol=1e-3, atol=1e-3)

    print("KERNEL_OK")
</pallas_src>

<mosaic_0001>
module attributes {stable_mosaic.version = 11 : i64} {
  func.func @_recurrent_kernel(%arg0: i32, %arg1: i32, %arg2: memref<1x1x4x32xf32, #tpu.memory_space<vmem>>, %arg3: memref<1x4x32xf32, #tpu.memory_space<vmem>>, %arg4: memref<1x32x128xf32, #tpu.memory_space<vmem>>, %arg5: memref<1x32x128xf32, #tpu.memory_space<vmem>>, %arg6: memref<1x1x128xf32, #tpu.memory_space<vmem>>, %arg7: memref<1x32x32xf32, #tpu.memory_space<vmem>>, %arg8: memref<1x1x32xf32, #tpu.memory_space<vmem>>, %arg9: memref<1x3x32x128xf32, #tpu.memory_space<vmem>>, %arg10: memref<1x32x128xf32, #tpu.memory_space<vmem>>, %arg11: memref<1x1x128xf32, #tpu.memory_space<vmem>>, %arg12: memref<1x1x4x32xf32, #tpu.memory_space<vmem>>, %arg13: memref<4x32xf32, #tpu.memory_space<vmem>>, %arg14: memref<4x32xf32, #tpu.memory_space<vmem>>, %arg15: memref<4x32xf32, #tpu.memory_space<vmem>>, %arg16: memref<4x32xf32, #tpu.memory_space<vmem>>) attributes {dimension_semantics = [#tpu.dimension_semantics<parallel>, #tpu.dimension_semantics<arbitrary>], iteration_bounds = array<i64: 2, 7>, scalar_prefetch = 0 : i64, scratch_operands = 4 : i64, tpu.core_type = #tpu.core_type<tc>, window_params = [{transform_indices = @transform_0, window_bounds = array<i64: 1, 1, 4, 32>}, {transform_indices = @transform_1, window_bounds = array<i64: 1, 4, 32>}, {transform_indices = @transform_2, window_bounds = array<i64: 1, 32, 128>}, {transform_indices = @transform_3, window_bounds = array<i64: 1, 32, 128>}, {transform_indices = @transform_4, window_bounds = array<i64: 1, 1, 128>}, {transform_indices = @transform_5, window_bounds = array<i64: 1, 32, 32>}, {transform_indices = @transform_6, window_bounds = array<i64: 1, 1, 32>}, {transform_indices = @transform_7, window_bounds = array<i64: 1, 3, 32, 128>}, {transform_indices = @transform_8, window_bounds = array<i64: 1, 32, 128>}, {transform_indices = @transform_9, window_bounds = array<i64: 1, 1, 128>}, {transform_indices = @transform_10, window_bounds = array<i64: 1, 1, 4, 32>}]} {
    %c0_i32 = arith.constant 0 : i32
    %0 = arith.cmpi eq, %arg1, %c0_i32 : i32
    %1 = arith.extui %0 : i1 to i32
    %c0_i32_0 = arith.constant 0 : i32
    %2 = arith.cmpi ne, %1, %c0_i32_0 : i32
    scf.if %2 {
      %cst_70 = arith.constant 0.000000e+00 : f32
      %105 = vector.broadcast %cst_70 : f32 to vector<4x32xf32>
      %c0_71 = arith.constant 0 : index
      %c0_72 = arith.constant 0 : index
      %106 = vector.load %arg13[%c0_71, %c0_72] : memref<4x32xf32, #tpu.memory_space<vmem>>, vector<4x32xf32>
      tpu.vector_store %arg13[%c0_71, %c0_72], %105 {strides = array<i32>} : memref<4x32xf32, #tpu.memory_space<vmem>>, vector<4x32xf32>,
      %cst_73 = arith.constant 0.000000e+00 : f32
      %107 = vector.broadcast %cst_73 : f32 to vector<4x32xf32>
      %c0_74 = arith.constant 0 : index
      %c0_75 = arith.constant 0 : index
      %108 = vector.load %arg14[%c0_74, %c0_75] : memref<4x32xf32, #tpu.memory_space<vmem>>, vector<4x32xf32>
      tpu.vector_store %arg14[%c0_74, %c0_75], %107 {strides = array<i32>} : memref<4x32xf32, #tpu.memory_space<vmem>>, vector<4x32xf32>,
      %cst_76 = arith.constant 0.000000e+00 : f32
      %109 = vector.broadcast %cst_76 : f32 to vector<4x32xf32>
      %c0_77 = arith.constant 0 : index
      %c0_78 = arith.constant 0 : index
      %110 = vector.load %arg15[%c0_77, %c0_78] : memref<4x32xf32, #tpu.memory_space<vmem>>, vector<4x32xf32>
      tpu.vector_store %arg15[%c0_77, %c0_78], %109 {strides = array<i32>} : memref<4x32xf32, #tpu.memory_space<vmem>>, vector<4x32xf32>,
      %cst_79 = arith.constant 0.000000e+00 : f32
      %111 = vector.broadcast %cst_79 : f32 to vector<4x32xf32>
      %c0_80 = arith.constant 0 : index
      %c0_81 = arith.constant 0 : index
      %112 = vector.load %arg16[%c0_80, %c0_81] : memref<4x32xf32, #tpu.memory_space<vmem>>, vector<4x32xf32>
      tpu.vector_store %arg16[%c0_80, %c0_81], %111 {strides = array<i32>} : memref<4x32xf32, #tpu.memory_space<vmem>>, vector<4x32xf32>,
    } else {
    }
    %c0 = arith.constant 0 : index
    %c0_1 = arith.constant 0 : index
    %c0_2 = arith.constant 0 : index
    %c0_3 = arith.constant 0 : index
    %3 = vector.load %arg2[%c0, %c0_1, %c0_2, %c0_3] : memref<1x1x4x32xf32, #tpu.memory_space<vmem>>, vector<1x1x4x32xf32>
    %4 = vector.shape_cast %3 : vector<1x1x4x32xf32> to vector<4x32xf32>
    %c0_4 = arith.constant 0 : index
    %c0_5 = arith.constant 0 : index
    %c0_6 = arith.constant 0 : index
    %5 = vector.load %arg3[%c0_4, %c0_5, %c0_6] : memref<1x4x32xf32, #tpu.memory_space<vmem>>, vector<1x4x32xf32>
    %6 = vector.shape_cast %5 : vector<1x4x32xf32> to vector<4x32xf32>
    %c0_7 = arith.constant 0 : index
    %c0_8 = arith.constant 0 : index
    %c0_9 = arith.constant 0 : index
    %7 = vector.load %arg4[%c0_7, %c0_8, %c0_9] : memref<1x32x128xf32, #tpu.memory_space<vmem>>, vector<1x32x128xf32>
    %8 = vector.shape_cast %7 : vector<1x32x128xf32> to vector<32x128xf32>
    %cst = arith.constant dense<0.000000e+00> : vector<4x128xf32>
    %9 = tpu.matmul %4, %8, %cst {dimension_numbers = #tpu.dot_dimension_numbers<[1], [0], [0], [1], [0, 0, 1, 1], [], []>} : vector<4x32xf32>, vector<32x128xf32>, vector<4x128xf32> -> vector<4x128xf32>
    %c0_10 = arith.constant 0 : index
    %c0_11 = arith.constant 0 : index
    %10 = vector.load %arg13[%c0_10, %c0_11] : memref<4x32xf32, #tpu.memory_space<vmem>>, vector<4x32xf32>
    %c0_12 = arith.constant 0 : index
    %c0_13 = arith.constant 0 : index
    %c0_14 = arith.constant 0 : index
    %11 = vector.load %arg5[%c0_12, %c0_13, %c0_14] : memref<1x32x128xf32, #tpu.memory_space<vmem>>, vector<1x32x128xf32>
    %12 = vector.shape_cast %11 : vector<1x32x128xf32> to vector<32x128xf32>
    %cst_15 = arith.constant dense<0.000000e+00> : vector<4x128xf32>
    %13 = tpu.matmul %10, %12, %cst_15 {dimension_numbers = #tpu.dot_dimension_numbers<[1], [0], [0], [1], [0, 0, 1, 1], [], []>} : vector<4x32xf32>, vector<32x128xf32>, vector<4x128xf32> -> vector<4x128xf32>
    %14 = arith.addf %9, %13 : vector<4x128xf32>
    %c0_16 = arith.constant 0 : index
    %c0_17 = arith.constant 0 : index
    %c0_18 = arith.constant 0 : index
    %15 = vector.load %arg6[%c0_16, %c0_17, %c0_18] : memref<1x1x128xf32, #tpu.memory_space<vmem>>, vector<1x1x128xf32>
    %16 = vector.shape_cast %15 : vector<1x1x128xf32> to vector<1x128xf32>
    %17 = vector.broadcast %16 : vector<1x128xf32> to vector<4x128xf32>
    %18 = arith.addf %14, %17 : vector<4x128xf32>
    %c0_19 = arith.constant 0 : index
    %c0_20 = arith.constant 0 : index
    %19 = vector.load %arg14[%c0_19, %c0_20] : memref<4x32xf32, #tpu.memory_space<vmem>>, vector<4x32xf32>
    %20 = vector.extract_strided_slice %18 {offsets = [0, 0], sizes = [4, 32], strides = [1, 1]} : vector<4x128xf32> to vector<4x32xf32>
    %21 = arith.negf %20 : vector<4x32xf32>
    %22 = math.exp %21 : vector<4x32xf32>
    %cst_21 = arith.constant 1.000000e+00 : f32
    %23 = vector.broadcast %cst_21 : f32 to vector<4x32xf32>
    %24 = arith.addf %23, %22 : vector<4x32xf32>
    %25 = arith.divf %23, %24 : vector<4x32xf32>
    %26 = vector.extract_strided_slice %18 {offsets = [0, 32], sizes = [4, 32], strides = [1, 1]} : vector<4x128xf32> to vector<4x32xf32>
    %27 = arith.negf %26 : vector<4x32xf32>
    %28 = math.exp %27 : vector<4x32xf32>
    %cst_22 = arith.constant 1.000000e+00 : f32
    %29 = vector.broadcast %cst_22 : f32 to vector<4x32xf32>
    %30 = arith.addf %29, %28 : vector<4x32xf32>
    %31 = arith.divf %29, %30 : vector<4x32xf32>
    %32 = vector.extract_strided_slice %18 {offsets = [0, 64], sizes = [4, 32], strides = [1, 1]} : vector<4x128xf32> to vector<4x32xf32>
    %33 = math.tanh %32 : vector<4x32xf32>
    %34 = vector.extract_strided_slice %18 {offsets = [0, 96], sizes = [4, 32], strides = [1, 1]} : vector<4x128xf32> to vector<4x32xf32>
    %35 = arith.negf %34 : vector<4x32xf32>
    %36 = math.exp %35 : vector<4x32xf32>
    %cst_23 = arith.constant 1.000000e+00 : f32
    %37 = vector.broadcast %cst_23 : f32 to vector<4x32xf32>
    %38 = arith.addf %37, %36 : vector<4x32xf32>
    %39 = arith.divf %37, %38 : vector<4x32xf32>
    %40 = arith.mulf %31, %19 : vector<4x32xf32>
    %41 = arith.mulf %25, %33 : vector<4x32xf32>
    %42 = arith.addf %40, %41 : vector<4x32xf32>
    %43 = math.tanh %42 : vector<4x32xf32>
    %44 = arith.mulf %39, %43 : vector<4x32xf32>
    %c0_24 = arith.constant 0 : index
    %c0_25 = arith.constant 0 : index
    %45 = vector.load %arg13[%c0_24, %c0_25] : memref<4x32xf32, #tpu.memory_space<vmem>>, vector<4x32xf32>
    tpu.vector_store %arg13[%c0_24, %c0_25], %44 {strides = array<i32>} : memref<4x32xf32, #tpu.memory_space<vmem>>, vector<4x32xf32>,
    %c0_26 = arith.constant 0 : index
    %c0_27 = arith.constant 0 : index
    %46 = vector.load %arg14[%c0_26, %c0_27] : memref<4x32xf32, #tpu.memory_space<vmem>>, vector<4x32xf32>
    tpu.vector_store %arg14[%c0_26, %c0_27], %42 {strides = array<i32>} : memref<4x32xf32, #tpu.memory_space<vmem>>, vector<4x32xf32>,
    %c0_28 = arith.constant 0 : index
    %c0_29 = arith.constant 0 : index
    %c0_30 = arith.constant 0 : index
    %47 = vector.load %arg7[%c0_28, %c0_29, %c0_30] : memref<1x32x32xf32, #tpu.memory_space<vmem>>, vector<1x32x32xf32>
    %48 = vector.shape_cast %47 : vector<1x32x32xf32> to vector<32x32xf32>
    %cst_31 = arith.constant dense<0.000000e+00> : vector<4x32xf32>
    %49 = tpu.matmul %44, %48, %cst_31 {dimension_numbers = #tpu.dot_dimension_numbers<[1], [0], [0], [1], [0, 0, 1, 1], [], []>} : vector<4x32xf32>, vector<32x32xf32>, vector<4x32xf32> -> vector<4x32xf32>
    %c0_32 = arith.constant 0 : index
    %c0_33 = arith.constant 0 : index
    %c0_34 = arith.constant 0 : index
    %50 = vector.load %arg8[%c0_32, %c0_33, %c0_34] : memref<1x1x32xf32, #tpu.memory_space<vmem>>, vector<1x1x32xf32>
    %51 = vector.shape_cast %50 : vector<1x1x32xf32> to vector<1x32xf32>
    %52 = vector.broadcast %51 : vector<1x32xf32> to vector<4x32xf32>
    %53 = arith.addf %49, %52 : vector<4x32xf32>
    %c0_35 = arith.constant 0 : index
    %c0_36 = arith.constant 0 : index
    %c0_37 = arith.constant 0 : index
    %c0_38 = arith.constant 0 : index
    %54 = vector.load %arg9[%c0_35, %c0_36, %c0_37, %c0_38] : memref<1x3x32x128xf32, #tpu.memory_space<vmem>>, vector<1x1x32x128xf32>
    %55 = vector.shape_cast %54 : vector<1x1x32x128xf32> to vector<32x128xf32>
    %cst_39 = arith.constant dense<0.000000e+00> : vector<4x128xf32>
    %56 = tpu.matmul %44, %55, %cst_39 {dimension_numbers = #tpu.dot_dimension_numbers<[1], [0], [0], [1], [0, 0, 1, 1], [], []>} : vector<4x32xf32>, vector<32x128xf32>, vector<4x128xf32> -> vector<4x128xf32>
    %c0_40 = arith.constant 0 : index
    %c1 = arith.constant 1 : index
    %c0_41 = arith.constant 0 : index
    %c0_42 = arith.constant 0 : index
    %57 = vector.load %arg9[%c0_40, %c1, %c0_41, %c0_42] : memref<1x3x32x128xf32, #tpu.memory_space<vmem>>, vector<1x1x32x128xf32>
    %58 = vector.shape_cast %57 : vector<1x1x32x128xf32> to vector<32x128xf32>
    %cst_43 = arith.constant dense<0.000000e+00> : vector<4x128xf32>
    %59 = tpu.matmul %53, %58, %cst_43 {dimension_numbers = #tpu.dot_dimension_numbers<[1], [0], [0], [1], [0, 0, 1, 1], [], []>} : vector<4x32xf32>, vector<32x128xf32>, vector<4x128xf32> -> vector<4x128xf32>
    %60 = arith.addf %56, %59 : vector<4x128xf32>
    %c0_44 = arith.constant 0 : index
    %c2 = arith.constant 2 : index
    %c0_45 = arith.constant 0 : index
    %c0_46 = arith.constant 0 : index
    %61 = vector.load %arg9[%c0_44, %c2, %c0_45, %c0_46] : memref<1x3x32x128xf32, #tpu.memory_space<vmem>>, vector<1x1x32x128xf32>
    %62 = vector.shape_cast %61 : vector<1x1x32x128xf32> to vector<32x128xf32>
    %cst_47 = arith.constant dense<0.000000e+00> : vector<4x128xf32>
    %63 = tpu.matmul %6, %62, %cst_47 {dimension_numbers = #tpu.dot_dimension_numbers<[1], [0], [0], [1], [0, 0, 1, 1], [], []>} : vector<4x32xf32>, vector<32x128xf32>, vector<4x128xf32> -> vector<4x128xf32>
    %64 = arith.addf %60, %63 : vector<4x128xf32>
    %c0_48 = arith.constant 0 : index
    %c0_49 = arith.constant 0 : index
    %65 = vector.load %arg15[%c0_48, %c0_49] : memref<4x32xf32, #tpu.memory_space<vmem>>, vector<4x32xf32>
    %c0_50 = arith.constant 0 : index
    %c0_51 = arith.constant 0 : index
    %c0_52 = arith.constant 0 : index
    %66 = vector.load %arg10[%c0_50, %c0_51, %c0_52] : memref<1x32x128xf32, #tpu.memory_space<vmem>>, vector<1x32x128xf32>
    %67 = vector.shape_cast %66 : vector<1x32x128xf32> to vector<32x128xf32>
    %cst_53 = arith.constant dense<0.000000e+00> : vector<4x128xf32>
    %68 = tpu.matmul %65, %67, %cst_53 {dimension_numbers = #tpu.dot_dimension_numbers<[1], [0], [0], [1], [0, 0, 1, 1], [], []>} : vector<4x32xf32>, vector<32x128xf32>, vector<4x128xf32> -> vector<4x128xf32>
    %69 = arith.addf %64, %68 : vector<4x128xf32>
    %c0_54 = arith.constant 0 : index
    %c0_55 = arith.constant 0 : index
    %c0_56 = arith.constant 0 : index
    %70 = vector.load %arg11[%c0_54, %c0_55, %c0_56] : memref<1x1x128xf32, #tpu.memory_space<vmem>>, vector<1x1x128xf32>
    %71 = vector.shape_cast %70 : vector<1x1x128xf32> to vector<1x128xf32>
    %72 = vector.broadcast %71 : vector<1x128xf32> to vector<4x128xf32>
    %73 = arith.addf %69, %72 : vector<4x128xf32>
    %c0_57 = arith.constant 0 : index
    %c0_58 = arith.constant 0 : index
    %74 = vector.load %arg16[%c0_57, %c0_58] : memref<4x32xf32, #tpu.memory_space<vmem>>, vector<4x32xf32>
    %75 = vector.extract_strided_slice %73 {offsets = [0, 0], sizes = [4, 32], strides = [1, 1]} : vector<4x128xf32> to vector<4x32xf32>
    %76 = arith.negf %75 : vector<4x32xf32>
    %77 = math.exp %76 : vector<4x32xf32>
    %cst_59 = arith.constant 1.000000e+00 : f32
    %78 = vector.broadcast %cst_59 : f32 to vector<4x32xf32>
    %79 = arith.addf %78, %77 : vector<4x32xf32>
    %80 = arith.divf %78, %79 : vector<4x32xf32>
    %81 = vector.extract_strided_slice %73 {offsets = [0, 32], sizes = [4, 32], strides = [1, 1]} : vector<4x128xf32> to vector<4x32xf32>
    %82 = arith.negf %81 : vector<4x32xf32>
    %83 = math.exp %82 : vector<4x32xf32>
    %cst_60 = arith.constant 1.000000e+00 : f32
    %84 = vector.broadcast %cst_60 : f32 to vector<4x32xf32>
    %85 = arith.addf %84, %83 : vector<4x32xf32>
    %86 = arith.divf %84, %85 : vector<4x32xf32>
    %87 = vector.extract_strided_slice %73 {offsets = [0, 64], sizes = [4, 32], strides = [1, 1]} : vector<4x128xf32> to vector<4x32xf32>
    %88 = math.tanh %87 : vector<4x32xf32>
    %89 = vector.extract_strided_slice %73 {offsets = [0, 96], sizes = [4, 32], strides = [1, 1]} : vector<4x128xf32> to vector<4x32xf32>
    %90 = arith.negf %89 : vector<4x32xf32>
    %91 = math.exp %90 : vector<4x32xf32>
    %cst_61 = arith.constant 1.000000e+00 : f32
    %92 = vector.broadcast %cst_61 : f32 to vector<4x32xf32>
    %93 = arith.addf %92, %91 : vector<4x32xf32>
    %94 = arith.divf %92, %93 : vector<4x32xf32>
    %95 = arith.mulf %86, %74 : vector<4x32xf32>
    %96 = arith.mulf %80, %88 : vector<4x32xf32>
    %97 = arith.addf %95, %96 : vector<4x32xf32>
    %98 = math.tanh %97 : vector<4x32xf32>
    %99 = arith.mulf %94, %98 : vector<4x32xf32>
    %c0_62 = arith.constant 0 : index
    %c0_63 = arith.constant 0 : index
    %100 = vector.load %arg15[%c0_62, %c0_63] : memref<4x32xf32, #tpu.memory_space<vmem>>, vector<4x32xf32>
    tpu.vector_store %arg15[%c0_62, %c0_63], %99 {strides = array<i32>} : memref<4x32xf32, #tpu.memory_space<vmem>>, vector<4x32xf32>,
    %c0_64 = arith.constant 0 : index
    %c0_65 = arith.constant 0 : index
    %101 = vector.load %arg16[%c0_64, %c0_65] : memref<4x32xf32, #tpu.memory_space<vmem>>, vector<4x32xf32>
    tpu.vector_store %arg16[%c0_64, %c0_65], %97 {strides = array<i32>} : memref<4x32xf32, #tpu.memory_space<vmem>>, vector<4x32xf32>,
    %c0_66 = arith.constant 0 : index
    %c0_67 = arith.constant 0 : index
    %c0_68 = arith.constant 0 : index
    %c0_69 = arith.constant 0 : index
    %102 = vector.load %arg12[%c0_66, %c0_67, %c0_68, %c0_69] : memref<1x1x4x32xf32, #tpu.memory_space<vmem>>, vector<1x1x4x32xf32>
    %103 = vector.shape_cast %102 : vector<1x1x4x32xf32> to vector<4x32xf32>
    %104 = vector.shape_cast %99 : vector<4x32xf32> to vector<1x1x4x32xf32>
    tpu.vector_store %arg12[%c0_66, %c0_67, %c0_68, %c0_69], %104 {strides = array<i32>} : memref<1x1x4x32xf32, #tpu.memory_space<vmem>>, vector<1x1x4x32xf32>,
    return
  }
  func.func @transform_0(%arg0: i32, %arg1: i32) -> (i32, i32, i32, i32) {
    %c0_i32 = arith.constant 0 : i32
    %c0_i32_0 = arith.constant 0 : i32
    %c0_i32_1 = arith.constant 0 : i32
    return %arg0, %arg1, %c0_i32, %c0_i32_0 : i32, i32, i32, i32
  }
  func.func @transform_1(%arg0: i32, %arg1: i32) -> (i32, i32, i32) {
    %c0_i32 = arith.constant 0 : i32
    %c0_i32_0 = arith.constant 0 : i32
    %c0_i32_1 = arith.constant 0 : i32
    return %arg0, %c0_i32, %c0_i32_0 : i32, i32, i32
  }
  func.func @transform_2(%arg0: i32, %arg1: i32) -> (i32, i32, i32) {
    %c0_i32 = arith.constant 0 : i32
    %c0_i32_0 = arith.constant 0 : i32
    %c0_i32_1 = arith.constant 0 : i32
    return %arg0, %c0_i32, %c0_i32_0 : i32, i32, i32
  }
  func.func @transform_3(%arg0: i32, %arg1: i32) -> (i32, i32, i32) {
    %c0_i32 = arith.constant 0 : i32
    %c0_i32_0 = arith.constant 0 : i32
    %c0_i32_1 = arith.constant 0 : i32
    return %arg0, %c0_i32, %c0_i32_0 : i32, i32, i32
  }
  func.func @transform_4(%arg0: i32, %arg1: i32) -> (i32, i32, i32) {
    %c0_i32 = arith.constant 0 : i32
    %c0_i32_0 = arith.constant 0 : i32
    %c0_i32_1 = arith.constant 0 : i32
    return %arg0, %c0_i32, %c0_i32_0 : i32, i32, i32
  }
  func.func @transform_5(%arg0: i32, %arg1: i32) -> (i32, i32, i32) {
    %c0_i32 = arith.constant 0 : i32
    %c0_i32_0 = arith.constant 0 : i32
    %c0_i32_1 = arith.constant 0 : i32
    return %arg0, %c0_i32, %c0_i32_0 : i32, i32, i32
  }
  func.func @transform_6(%arg0: i32, %arg1: i32) -> (i32, i32, i32) {
    %c0_i32 = arith.constant 0 : i32
    %c0_i32_0 = arith.constant 0 : i32
    %c0_i32_1 = arith.constant 0 : i32
    return %arg0, %c0_i32, %c0_i32_0 : i32, i32, i32
  }
  func.func @transform_7(%arg0: i32, %arg1: i32) -> (i32, i32, i32, i32) {
    %c0_i32 = arith.constant 0 : i32
    %c0_i32_0 = arith.constant 0 : i32
    %c0_i32_1 = arith.constant 0 : i32
    %c0_i32_2 = arith.constant 0 : i32
    return %arg0, %c0_i32, %c0_i32_0, %c0_i32_1 : i32, i32, i32, i32
  }
  func.func @transform_8(%arg0: i32, %arg1: i32) -> (i32, i32, i32) {
    %c0_i32 = arith.constant 0 : i32
    %c0_i32_0 = arith.constant 0 : i32
    %c0_i32_1 = arith.constant 0 : i32
    return %arg0, %c0_i32, %c0_i32_0 : i32, i32, i32
  }
  func.func @transform_9(%arg0: i32, %arg1: i32) -> (i32, i32, i32) {
    %c0_i32 = arith.constant 0 : i32
    %c0_i32_0 = arith.constant 0 : i32
    %c0_i32_1 = arith.constant 0 : i32
    return %arg0, %c0_i32, %c0_i32_0 : i32, i32, i32
  }
  func.func @transform_10(%arg0: i32, %arg1: i32) -> (i32, i32, i32, i32) {
    %c0_i32 = arith.constant 0 : i32
    %c0_i32_0 = arith.constant 0 : i32
    %c0_i32_1 = arith.constant 0 : i32
    return %arg0, %arg1, %c0_i32, %c0_i32_0 : i32, i32, i32, i32
  }
}

</mosaic_0001>

<llo_original>
// kernel: tpu_custom_call.1
$region0: #{tpu_custom_call.1}
  #allocation0 [shape = 'u32[]', space=smem, size = 0x4, offset = 0x4, fixed_abs, tag = 'smem constant byte address 0x4 - core index']
  #allocation1 [shape = 'u32[144,128]{1,0:T(1,128)}', space=vmem, size = 0x12000, scoped, tag = 'internal scratch']
  #allocation2 [shape = 'f32[4,32]{1,0:T(4,128)}', space=vmem, size = 0x800, scoped, tag = 'scratch operand']
  #allocation3 [shape = 'f32[4,32]{1,0:T(4,128)}', space=vmem, size = 0x800, scoped, tag = 'scratch operand']
  #allocation4 [shape = 'f32[4,32]{1,0:T(4,128)}', space=vmem, size = 0x800, scoped, tag = 'scratch operand']
  #allocation5 [shape = 'f32[4,32]{1,0:T(4,128)}', space=vmem, size = 0x800, scoped, tag = 'scratch operand']
  %s0 = inlined_call_operand.hbm [shape: f32[2,7,4,32], index: 0, kind: input, shape index: {}]
  %s1 = inlined_call_operand.hbm [shape: f32[2,4,32], index: 1, kind: input, shape index: {}]
  %s2 = inlined_call_operand.hbm [shape: f32[2,32,128], index: 2, kind: input, shape index: {}]
  %s3 = inlined_call_operand.hbm [shape: f32[2,32,128], index: 3, kind: input, shape index: {}]
  %s4 = inlined_call_operand.vmem [shape: f32[2,1,128], index: 4, kind: input, shape index: {}]
  %s5 = inlined_call_operand.hbm [shape: f32[2,32,32], index: 5, kind: input, shape index: {}]
  %s6 = inlined_call_operand.vmem [shape: f32[2,1,32], index: 6, kind: input, shape index: {}]
  %s7 = inlined_call_operand.hbm [shape: f32[2,3,32,128], index: 7, kind: input, shape index: {}]
  %s8 = inlined_call_operand.hbm [shape: f32[2,32,128], index: 8, kind: input, shape index: {}]
  %s9 = inlined_call_operand.vmem [shape: f32[2,1,128], index: 9, kind: input, shape index: {}]
  %s10 = inlined_call_operand.hbm [shape: f32[2,7,4,32], index: 10, kind: output, shape index: {}]
  %s11 = sld [smem:[#allocation0]]
  $region105: #{tpu_custom_call.1} parent=0
    _
  %s13 = ssub.s32 1, %s11
  %s14 = scalar_select 0, %s13, %s11
  $region1: #{tpu_custom_call.1} parent=0
    #allocation6 [shape = 'u8[4096]{0}', space=vmem, size = 0x1000, scoped, tag = 'input window, operand 0']
    #allocation7 [shape = 's32[2]{0}', space=sflag, size = 0x8, scoped, tag = 'scoped memory for tpu_custom_call.1']
    #allocation8 [shape = 's32[2]{0}', space=sflag, size = 0x8, scoped, tag = 'scoped memory for tpu_custom_call.1']
    #allocation9 [shape = 'u8[4096]{0}', space=vmem, size = 0x1000, scoped, tag = 'input window, operand 1']
    #allocation10 [shape = 's32[2]{0}', space=sflag, size = 0x8, scoped, tag = 'scoped memory for tpu_custom_call.1']
    #allocation11 [shape = 'u8[32768]{0}', space=vmem, size = 0x8000, scoped, tag = 'input window, operand 2']
    #allocation12 [shape = 'u8[32768]{0}', space=vmem, size = 0x8000, scoped, tag = 'input window, operand 3']
    #allocation13 [shape = 's32[2]{0}', space=sflag, size = 0x8, scoped, tag = 'scoped memory for tpu_custom_call.1']
    #allocation14 [shape = 'u8[32768]{0}', space=vmem, size = 0x8000, scoped, tag = 'input window, operand 5']
    #allocation15 [shape = 'u8[98304]{0}', space=vmem, size = 0x18000, scoped, tag = 'input window, operand 7']
    #allocation16 [shape = 's32[2]{0}', space=sflag, size = 0x8, scoped, tag = 'scoped memory for tpu_custom_call.1']
    #allocation17 [shape = 'u8[32768]{0}', space=vmem, size = 0x8000, scoped, tag = 'input window, operand 8']
    #allocation18 [shape = 'u8[4096]{0}', space=vmem, size = 0x1000, scoped, tag = 'output window, operand 0']
    %15 = vsyncpa [#allocation7], 0
    %s16 = scalar_lea.sflag [#allocation7], 1
    %17 = vsyncpa %s16, 0
    %18 = vsyncpa [#allocation10], 0
    %s19 = scalar_lea.sflag [#allocation10], 1
    %20 = vsyncpa %s19, 0
    %21 = vsyncpa [#allocation13], 0
    %s22 = scalar_lea.sflag [#allocation13], 1
    %23 = vsyncpa %s22, 0
    %24 = vsyncpa [#allocation16], 0
    %s25 = scalar_lea.sflag [#allocation16], 1
    %26 = vsyncpa %s25, 0
    %27 = vsyncpa [#allocation8], 0
    %s28 = scalar_lea.sflag [#allocation8], 1
    %29 = vsyncpa %s28, 0
    loop: start=0, step=1, limit=16
    $region2: #{tpu_custom_call.1} parent=1 // loop_pre_header
      _
    $region3: #{tpu_custom_call.1} parent=1 // loop_header
      %s31 = sphi 0, %s35
      %p32 = scmp.ge.s32.totalorder %s31, 16
      %s38 = sphi 0, %s50
      %s39 = sphi 0, %s46
      %s40 = sphi 0, %s38
      %s41 = sphi 0, %s39
      %s42 = sphi 0, %s40
      %s43 = sphi 0, %s41
      %s55 = sphi 0, %s57
      %s58 = sphi 0, %s55
      %s59 = sphi 0, %s58
      %s75 = sphi 0, %s59
      %s81 = sphi 0, %s83
      %s84 = sphi 0, %s81
      %s85 = sphi 0, %s84
      %s101 = sphi 0, %s85
      %s107 = sphi 0, %s109
      %s110 = sphi 0, %s107
      %s111 = sphi 0, %s110
      %s127 = sphi 0, %s111
      %s133 = sphi 0, %s135
      %s136 = sphi 0, %s133
      %s137 = sphi 0, %s136
      %s153 = sphi 0, %s137
      %s159 = sphi 0, %s161
      %s162 = sphi 0, %s159
      %s163 = sphi 0, %s162
      %s179 = sphi 0, %s163
      %s185 = sphi 0, %s187
      %s188 = sphi 0, %s185
      %s189 = sphi 0, %s188
      %s205 = sphi 0, %s189
      %s211 = sphi 0, %s213
      %s214 = sphi 0, %s211
      %s215 = sphi 0, %s214
      %s231 = sphi 0, %s215
      %s237 = sphi 0, %s239
      %s240 = sphi 0, %s237
      %s241 = sphi 0, %s240
      %s257 = sphi 0, %s241
      %s263 = sphi 0, %s265
      %s266 = sphi 0, %s263
      %s267 = sphi 0, %s266
      %s283 = sphi 0, %s267
      %s289 = sphi 0, %s291
      %s292 = sphi 0, %s289
      %s293 = sphi 0, %s292
      %s309 = sphi 0, %s293
      %s317 = sphi 0, %s319
      %s320 = sphi 0, %s317
      %s321 = sphi 0, %s320
      %s337 = sphi 0, %s321
    $region4: #{tpu_custom_call.1} parent=1 // loop_header_branch
      %34 = sbr.rel (%p32) target = $region8
    $region5: #{tpu_custom_call.1} parent=1 // loop_body
      %s36 = ssub.s32 %s31, 1
      %s37 = ssub.s32 %s31, 2
      %s44 = sadd.s32 1, %s39
      %p45 = scmp.ge.s32.totalorder %s44, 7
      %s46 = scalar_select %p45, 0, %s44
      %s47 = sadd.s32 1, %s38
      %s48 = scalar_select %p45, %s47, %s38
      %p49 = scmp.ge.s32.totalorder %s48, 2
      %s50 = scalar_select %p49, 0, %s48
      %s51 = ssub.s32 %s38, %s50
      %s52 = ssub.s32 %s39, %s46
      %s53 = sor.u32 %s51, %s52
      %p54 = scmp.eq.s32.totalorder %s53, 0
      %s56 = sadd.s32 %s55, 1
      %s57 = scalar_select %p54, %s55, %s56
      %p60 = pneg %p54
      %p61 = scmp.eq.s32.totalorder %s31, 13
      %p62 = por %p60, %p61
      %p63 = scmp.ne.s32.totalorder %s55, %s58
      %p64 = scmp.eq.s32.totalorder %s31, 0
      %p65 = por %p63, %p64
      %p66 = scmp.ne.s32.totalorder %s55, %s58
      %p67 = scmp.eq.s32.totalorder %s36, 13
      %p68 = por %p66, %p67
      %p69 = scmp.ne.s32.totalorder %s58, %s59
      %p70 = scmp.eq.s32.totalorder %s36, 0
      %p71 = por %p69, %p70
      %p72 = scmp.ne.s32.totalorder %s58, %s59
      %p73 = scmp.eq.s32.totalorder %s37, 13
      %p74 = por %p72, %p73
      %p76 = scmp.ne.s32.totalorder %s59, %s75
      %p77 = scmp.eq.s32.totalorder %s37, 0
      %p78 = por %p76, %p77
      %s79 = ssub.s32 %s38, %s50
      %p80 = scmp.eq.s32.totalorder %s79, 0
      %s82 = sadd.s32 %s81, 1
      %s83 = scalar_select %p80, %s81, %s82
      %p86 = pneg %p80
      %p87 = scmp.eq.s32.totalorder %s31, 13
      %p88 = por %p86, %p87
      %p89 = scmp.ne.s32.totalorder %s81, %s84
      %p90 = scmp.eq.s32.totalorder %s31, 0
      %p91 = por %p89, %p90
      %p92 = scmp.ne.s32.totalorder %s81, %s84
      %p93 = scmp.eq.s32.totalorder %s36, 13
      %p94 = por %p92, %p93
      %p95 = scmp.ne.s32.totalorder %s84, %s85
      %p96 = scmp.eq.s32.totalorder %s36, 0
      %p97 = por %p95, %p96
      %p98 = scmp.ne.s32.totalorder %s84, %s85
      %p99 = scmp.eq.s32.totalorder %s37, 13
      %p100 = por %p98, %p99
      %p102 = scmp.ne.s32.totalorder %s85, %s101
      %p103 = scmp.eq.s32.totalorder %s37, 0
      %p104 = por %p102, %p103
      %s105 = ssub.s32 %s38, %s50
      %p106 = scmp.eq.s32.totalorder %s105, 0
      %s108 = sadd.s32 %s107, 1
      %s109 = scalar_select %p106, %s107, %s108
      %p112 = pneg %p106
      %p113 = scmp.eq.s32.totalorder %s31, 13
      %p114 = por %p112, %p113
      %p115 = scmp.ne.s32.totalorder %s107, %s110
      %p116 = scmp.eq.s32.totalorder %s31, 0
      %p117 = por %p115, %p116
      %p118 = scmp.ne.s32.totalorder %s107, %s110
      %p119 = scmp.eq.s32.totalorder %s36, 13
      %p120 = por %p118, %p119
      %p121 = scmp.ne.s32.totalorder %s110, %s111
      %p122 = scmp.eq.s32.totalorder %s36, 0
      %p123 = por %p121, %p122
      %p124 = scmp.ne.s32.totalorder %s110, %s111
      %p125 = scmp.eq.s32.totalorder %s37, 13
      %p126 = por %p124, %p125
      %p128 = scmp.ne.s32.totalorder %s111, %s127
      %p129 = scmp.eq.s32.totalorder %s37, 0
      %p130 = por %p128, %p129
      %s131 = ssub.s32 %s38, %s50
      %p132 = scmp.eq.s32.totalorder %s131, 0
      %s134 = sadd.s32 %s133, 1
      %s135 = scalar_select %p132, %s133, %s134
      %p138 = pneg %p132
      %p139 = scmp.eq.s32.totalorder %s31, 13
      %p140 = por %p138, %p139
      %p141 = scmp.ne.s32.totalorder %s133, %s136
      %p142 = scmp.eq.s32.totalorder %s31, 0
      %p143 = por %p141, %p142
      %p144 = scmp.ne.s32.totalorder %s133, %s136
      %p145 = scmp.eq.s32.totalorder %s36, 13
      %p146 = por %p144, %p145
      %p147 = scmp.ne.s32.totalorder %s136, %s137
      %p148 = scmp.eq.s32.totalorder %s36, 0
      %p149 = por %p147, %p148
      %p150 = scmp.ne.s32.totalorder %s136, %s137
      %p151 = scmp.eq.s32.totalorder %s37, 13
      %p152 = por %p150, %p151
      %p154 = scmp.ne.s32.totalorder %s137, %s153
      %p155 = scmp.eq.s32.totalorder %s37, 0
      %p156 = por %p154, %p155
      %s157 = ssub.s32 %s38, %s50
      %p158 = scmp.eq.s32.totalorder %s157, 0
      %s160 = sadd.s32 %s159, 1
      %s161 = scalar_select %p158, %s159, %s160
      %p164 = pneg %p158
      %p165 = scmp.eq.s32.totalorder %s31, 13
      %p166 = por %p164, %p165
      %p167 = scmp.ne.s32.totalorder %s159, %s162
      %p168 = scmp.eq.s32.totalorder %s31, 0
      %p169 = por %p167, %p168
      %p170 = scmp.ne.s32.totalorder %s159, %s162
      %p171 = scmp.eq.s32.totalorder %s36, 13
      %p172 = por %p170, %p171
      %p173 = scmp.ne.s32.totalorder %s162, %s163
      %p174 = scmp.eq.s32.totalorder %s36, 0
      %p175 = por %p173, %p174
      %p176 = scmp.ne.s32.totalorder %s162, %s163
      %p177 = scmp.eq.s32.totalorder %s37, 13
      %p178 = por %p176, %p177
      %p180 = scmp.ne.s32.totalorder %s163, %s179
      %p181 = scmp.eq.s32.totalorder %s37, 0
      %p182 = por %p180, %p181
      %s183 = ssub.s32 %s38, %s50
      %p184 = scmp.eq.s32.totalorder %s183, 0
      %s186 = sadd.s32 %s185, 1
      %s187 = scalar_select %p184, %s185, %s186
      %p190 = pneg %p184
      %p191 = scmp.eq.s32.totalorder %s31, 13
      %p192 = por %p190, %p191
      %p193 = scmp.ne.s32.totalorder %s185, %s188
      %p194 = scmp.eq.s32.totalorder %s31, 0
      %p195 = por %p193, %p194
      %p196 = scmp.ne.s32.totalorder %s185, %s188
      %p197 = scmp.eq.s32.totalorder %s36, 13
      %p198 = por %p196, %p197
      %p199 = scmp.ne.s32.totalorder %s188, %s189
      %p200 = scmp.eq.s32.totalorder %s36, 0
      %p201 = por %p199, %p200
      %p202 = scmp.ne.s32.totalorder %s188, %s189
      %p203 = scmp.eq.s32.totalorder %s37, 13
      %p204 = por %p202, %p203
      %p206 = scmp.ne.s32.totalorder %s189, %s205
      %p207 = scmp.eq.s32.totalorder %s37, 0
      %p208 = por %p206, %p207
      %s209 = ssub.s32 %s38, %s50
      %p210 = scmp.eq.s32.totalorder %s209, 0
      %s212 = sadd.s32 %s211, 1
      %s213 = scalar_select %p210, %s211, %s212
      %p216 = pneg %p210
      %p217 = scmp.eq.s32.totalorder %s31, 13
      %p218 = por %p216, %p217
      %p219 = scmp.ne.s32.totalorder %s211, %s214
      %p220 = scmp.eq.s32.totalorder %s31, 0
      %p221 = por %p219, %p220
      %p222 = scmp.ne.s32.totalorder %s211, %s214
      %p223 = scmp.eq.s32.totalorder %s36, 13
      %p224 = por %p222, %p223
      %p225 = scmp.ne.s32.totalorder %s214, %s215
      %p226 = scmp.eq.s32.totalorder %s36, 0
      %p227 = por %p225, %p226
      %p228 = scmp.ne.s32.totalorder %s214, %s215
      %p229 = scmp.eq.s32.totalorder %s37, 13
      %p230 = por %p228, %p229
      %p232 = scmp.ne.s32.totalorder %s215, %s231
      %p233 = scmp.eq.s32.totalorder %s37, 0
      %p234 = por %p232, %p233
      %s235 = ssub.s32 %s38, %s50
      %p236 = scmp.eq.s32.totalorder %s235, 0
      %s238 = sadd.s32 %s237, 1
      %s239 = scalar_select %p236, %s237, %s238
      %p242 = pneg %p236
      %p243 = scmp.eq.s32.totalorder %s31, 13
      %p244 = por %p242, %p243
      %p245 = scmp.ne.s32.totalorder %s237, %s240
      %p246 = scmp.eq.s32.totalorder %s31, 0
      %p247 = por %p245, %p246
      %p248 = scmp.ne.s32.totalorder %s237, %s240
      %p249 = scmp.eq.s32.totalorder %s36, 13
      %p250 = por %p248, %p249
      %p251 = scmp.ne.s32.totalorder %s240, %s241
      %p252 = scmp.eq.s32.totalorder %s36, 0
      %p253 = por %p251, %p252
      %p254 = scmp.ne.s32.totalorder %s240, %s241
      %p255 = scmp.eq.s32.totalorder %s37, 13
      %p256 = por %p254, %p255
      %p258 = scmp.ne.s32.totalorder %s241, %s257
      %p259 = scmp.eq.s32.totalorder %s37, 0
      %p260 = por %p258, %p259
      %s261 = ssub.s32 %s38, %s50
      %p262 = scmp.eq.s32.totalorder %s261, 0
      %s264 = sadd.s32 %s263, 1
      %s265 = scalar_select %p262, %s263, %s264
      %p268 = pneg %p262
      %p269 = scmp.eq.s32.totalorder %s31, 13
      %p270 = por %p268, %p269
      %p271 = scmp.ne.s32.totalorder %s263, %s266
      %p272 = scmp.eq.s32.totalorder %s31, 0
      %p273 = por %p271, %p272
      %p274 = scmp.ne.s32.totalorder %s263, %s266
      %p275 = scmp.eq.s32.totalorder %s36, 13
      %p276 = por %p274, %p275
      %p277 = scmp.ne.s32.totalorder %s266, %s267
      %p278 = scmp.eq.s32.totalorder %s36, 0
      %p279 = por %p277, %p278
      %p280 = scmp.ne.s32.totalorder %s266, %s267
      %p281 = scmp.eq.s32.totalorder %s37, 13
      %p282 = por %p280, %p281
      %p284 = scmp.ne.s32.totalorder %s267, %s283
      %p285 = scmp.eq.s32.totalorder %s37, 0
      %p286 = por %p284, %p285
      %s287 = ssub.s32 %s38, %s50
      %p288 = scmp.eq.s32.totalorder %s287, 0
      %s290 = sadd.s32 %s289, 1
      %s291 = scalar_select %p288, %s289, %s290
      %p294 = pneg %p288
      %p295 = scmp.eq.s32.totalorder %s31, 13
      %p296 = por %p294, %p295
      %p297 = scmp.ne.s32.totalorder %s289, %s292
      %p298 = scmp.eq.s32.totalorder %s31, 0
      %p299 = por %p297, %p298
      %p300 = scmp.ne.s32.totalorder %s289, %s292
      %p301 = scmp.eq.s32.totalorder %s36, 13
      %p302 = por %p300, %p301
      %p303 = scmp.ne.s32.totalorder %s292, %s293
      %p304 = scmp.eq.s32.totalorder %s36, 0
      %p305 = por %p303, %p304
      %p306 = scmp.ne.s32.totalorder %s292, %s293
      %p307 = scmp.eq.s32.totalorder %s37, 13
      %p308 = por %p306, %p307
      %p310 = scmp.ne.s32.totalorder %s293, %s309
      %p311 = scmp.eq.s32.totalorder %s37, 0
      %p312 = por %p310, %p311
      %s313 = ssub.s32 %s38, %s50
      %s314 = ssub.s32 %s39, %s46
      %s315 = sor.u32 %s313, %s314
      %p316 = scmp.eq.s32.totalorder %s315, 0
      %s318 = sadd.s32 %s317, 1
      %s319 = scalar_select %p316, %s317, %s318
      %p322 = pneg %p316
      %p323 = scmp.eq.s32.totalorder %s31, 13
      %p324 = por %p322, %p323
      %p325 = scmp.ne.s32.totalorder %s317, %s320
      %p326 = scmp.eq.s32.totalorder %s31, 0
      %p327 = por %p325, %p326
      %p328 = scmp.ne.s32.totalorder %s317, %s320
      %p329 = scmp.eq.s32.totalorder %s36, 13
      %p330 = por %p328, %p329
      %p331 = scmp.ne.s32.totalorder %s320, %s321
      %p332 = scmp.eq.s32.totalorder %s36, 0
      %p333 = por %p331, %p332
      %p334 = scmp.ne.s32.totalorder %s320, %s321
      %p335 = scmp.eq.s32.totalorder %s37, 13
      %p336 = por %p334, %p335
      %p338 = scmp.ne.s32.totalorder %s321, %s337
      %p339 = scmp.eq.s32.totalorder %s37, 0
      %p340 = por %p338, %p339
      %p341 = scmp.le.s32.totalorder 1, %s31
      %p342 = scmp.lt.s32.totalorder %s31, 15
      %p343 = pnand %p341, %p342
      %p344 = pneg %p343
      // Predicated region
      $region9: #{tpu_custom_call.1} parent=5 // pred_check
        _
      $region10: #{tpu_custom_call.1} parent=5 // pred_check_branch
        %346 = sbr.rel (%p343) target = $region12
      $region11: #{tpu_custom_call.1} parent=5 // pred_region
        %s347 = ssub.s32 %s31, 1
      $region12: #{tpu_custom_call.1} parent=5 // pred_fallthru
        _
      %p348 = scmp.lt.s32.totalorder %s31, 14
      // Predicated region
      $region13: #{tpu_custom_call.1} parent=5 // pred_check
        %p349 = pneg %p348
      $region14: #{tpu_custom_call.1} parent=5 // pred_check_branch
        %351 = sbr.rel (%p349) target = $region16
      $region15: #{tpu_custom_call.1} parent=5 // pred_region
        // Predicated region
        $region17: #{tpu_custom_call.1} parent=15 // pred_check
          %p352 = pneg %p65
        $region18: #{tpu_custom_call.1} parent=15 // pred_check_branch
          %354 = sbr.rel (%p352) target = $region20
        $region19: #{tpu_custom_call.1} parent=15 // pred_region
          %s355 = sand.u32 %s55, 1
          %s356 = scalar_lea.sflag [#allocation7], %s355
          %s357 = sand.u32 %s55, 1
          %s358 = smul.addr %s357, 4
          %s359 = scalar_lea.vmem [#allocation6], %s358
          %s361 = ssub.s32 64, 64
          %362 = vsyncadd %s356, %s361
          %s363 = smul.addr %s38, 7
          %s364 = sadd.s32 %s39, %s363
          %s365 = smul.addr %s364, 64
          %s366 = scalar_lea.hbm %s0, %s365
          %s368 = sshll.u32 %s359, 4
          %s369 = int_to_ptr.vmem [resolvable:$true] %s368
          %371 = dma.hbm_to_vmem [thread:$0]  %s366, 64, %s369, %s356
        $region20: #{tpu_custom_call.1} parent=15 // pred_fallthru
          _
        // Predicated region
        $region21: #{tpu_custom_call.1} parent=15 // pred_check
          %p372 = pneg %p91
        $region22: #{tpu_custom_call.1} parent=15 // pred_check_branch
          %374 = sbr.rel (%p372) target = $region24
        $region23: #{tpu_custom_call.1} parent=15 // pred_region
          %s375 = sand.u32 %s31, 1
          %s376 = scalar_lea.sflag [#allocation10], %s375
          %s377 = sand.u32 %s81, 1
          %s378 = smul.addr %s377, 4
          %s379 = scalar_lea.vmem [#allocation9], %s378
          %s381 = ssub.s32 64, 64
          %382 = vsyncadd %s376, %s381
          %s383 = smul.addr %s38, 64
          %s384 = scalar_lea.hbm %s1, %s383
          %s386 = sshll.u32 %s379, 4
          %s387 = int_to_ptr.vmem [resolvable:$true] %s386
          %389 = dma.hbm_to_vmem [thread:$0]  %s384, 64, %s387, %s376
        $region24: #{tpu_custom_call.1} parent=15 // pred_fallthru
          _
        // Predicated region
        $region25: #{tpu_custom_call.1} parent=15 // pred_check
          %p390 = pneg %p117
        $region26: #{tpu_custom_call.1} parent=15 // pred_check_branch
          %392 = sbr.rel (%p390) target = $region28
        $region27: #{tpu_custom_call.1} parent=15 // pred_region
          %s393 = sand.u32 %s31, 1
          %s394 = scalar_lea.sflag [#allocation10], %s393
          %s395 = sand.u32 %s107, 1
          %s396 = smul.addr %s395, 32
          %s397 = scalar_lea.vmem [#allocation11], %s396
          %s399 = ssub.s32 512, 512
          %400 = vsyncadd %s394, %s399
          %s401 = smul.addr %s38, 4
          %s402 = smul.addr %s401, 128
          %s403 = scalar_lea.hbm %s2, %s402
          %s404 = sshll.u32 %s397, 4
          %s405 = int_to_ptr.vmem [resolvable:$true] %s404
          %410 = dma.hbm_to_vmem [thread:$0]  %s403, 512, %s405, %s394, 128, 128, 8
        $region28: #{tpu_custom_call.1} parent=15 // pred_fallthru
          _
        // Predicated region
        $region29: #{tpu_custom_call.1} parent=15 // pred_check
          %p411 = pneg %p143
        $region30: #{tpu_custom_call.1} parent=15 // pred_check_branch
          %413 = sbr.rel (%p411) target = $region32
        $region31: #{tpu_custom_call.1} parent=15 // pred_region
          %s414 = sand.u32 %s31, 1
          %s415 = scalar_lea.sflag [#allocation13], %s414
          %s416 = sand.u32 %s133, 1
          %s417 = smul.addr %s416, 32
          %s418 = scalar_lea.vmem [#allocation12], %s417
          %s420 = ssub.s32 512, 512
          %421 = vsyncadd %s415, %s420
          %s422 = smul.addr %s38, 4
          %s423 = smul.addr %s422, 128
          %s424 = scalar_lea.hbm %s3, %s423
          %s425 = sshll.u32 %s418, 4
          %s426 = int_to_ptr.vmem [resolvable:$true] %s425
          %431 = dma.hbm_to_vmem [thread:$0]  %s424, 512, %s426, %s415, 128, 128, 8
        $region32: #{tpu_custom_call.1} parent=15 // pred_fallthru
          _
        // Predicated region
        $region33: #{tpu_custom_call.1} parent=15 // pred_check
          %p432 = pneg %p169
        $region34: #{tpu_custom_call.1} parent=15 // pred_check_branch
          %434 = sbr.rel (%p432) target = $region36
        $region35: #{tpu_custom_call.1} parent=15 // pred_region
          %p435 = scmp.lt.s32.totalorder %s38, 1
          %s436 = scalar_select %p435, %s38, 1
          %s437 = scalar_lea.vmem %s4, %s436
        $region36: #{tpu_custom_call.1} parent=15 // pred_fallthru
          _
        // Predicated region
        $region37: #{tpu_custom_call.1} parent=15 // pred_check
          %p438 = pneg %p195
        $region38: #{tpu_custom_call.1} parent=15 // pred_check_branch
          %440 = sbr.rel (%p438) target = $region40
        $region39: #{tpu_custom_call.1} parent=15 // pred_region
          %s441 = sand.u32 %s31, 1
          %s442 = scalar_lea.sflag [#allocation13], %s441
          %s443 = sand.u32 %s185, 1
          %s444 = smul.addr %s443, 32
          %s445 = scalar_lea.vmem [#allocation14], %s444
          %s447 = ssub.s32 512, 512
          %448 = vsyncadd %s442, %s447
          %s449 = smul.addr %s38, 4
          %s450 = smul.addr %s449, 128
          %s451 = scalar_lea.hbm %s5, %s450
          %s452 = sshll.u32 %s445, 4
          %s453 = int_to_ptr.vmem [resolvable:$true] %s452
          %458 = dma.hbm_to_vmem [thread:$0]  %s451, 512, %s453, %s442, 128, 128, 8
        $region40: #{tpu_custom_call.1} parent=15 // pred_fallthru
          _
        // Predicated region
        $region41: #{tpu_custom_call.1} parent=15 // pred_check
          %p459 = pneg %p221
        $region42: #{tpu_custom_call.1} parent=15 // pred_check_branch
          %461 = sbr.rel (%p459) target = $region44
        $region43: #{tpu_custom_call.1} parent=15 // pred_region
          %p462 = scmp.lt.s32.totalorder %s38, 1
          %s463 = scalar_select %p462, %s38, 1
          %s464 = scalar_lea.vmem %s6, %s463
        $region44: #{tpu_custom_call.1} parent=15 // pred_fallthru
          _
        // Predicated region
        $region45: #{tpu_custom_call.1} parent=15 // pred_check
          %p465 = pneg %p247
        $region46: #{tpu_custom_call.1} parent=15 // pred_check_branch
          %467 = sbr.rel (%p465) target = $region48
        $region47: #{tpu_custom_call.1} parent=15 // pred_region
          %s468 = sand.u32 %s31, 1
          %s469 = scalar_lea.sflag [#allocation16], %s468
          %s470 = sand.u32 %s237, 1
          %s471 = smul.addr %s470, 96
          %s472 = scalar_lea.vmem [#allocation15], %s471
          %s474 = ssub.s32 1536, 1536
          %475 = vsyncadd %s469, %s474
          %s476 = smul.addr %s38, 12
          %s477 = smul.addr %s476, 128
          %s478 = scalar_lea.hbm %s7, %s477
          %s479 = sshll.u32 %s472, 4
          %s480 = int_to_ptr.vmem [resolvable:$true] %s479
          %485 = dma.hbm_to_vmem [thread:$0]  %s478, 1536, %s480, %s469, 128, 128, 8
        $region48: #{tpu_custom_call.1} parent=15 // pred_fallthru
          _
        // Predicated region
        $region49: #{tpu_custom_call.1} parent=15 // pred_check
          %p486 = pneg %p273
        $region50: #{tpu_custom_call.1} parent=15 // pred_check_branch
          %488 = sbr.rel (%p486) target = $region52
        $region51: #{tpu_custom_call.1} parent=15 // pred_region
          %s489 = sand.u32 %s31, 1
          %s490 = scalar_lea.sflag [#allocation16], %s489
          %s491 = sand.u32 %s263, 1
          %s492 = smul.addr %s491, 32
          %s493 = scalar_lea.vmem [#allocation17], %s492
          %s495 = ssub.s32 512, 512
          %496 = vsyncadd %s490, %s495
          %s497 = smul.addr %s38, 4
          %s498 = smul.addr %s497, 128
          %s499 = scalar_lea.hbm %s8, %s498
          %s500 = sshll.u32 %s493, 4
          %s501 = int_to_ptr.vmem [resolvable:$true] %s500
          %506 = dma.hbm_to_vmem [thread:$0]  %s499, 512, %s501, %s490, 128, 128, 8
        $region52: #{tpu_custom_call.1} parent=15 // pred_fallthru
          _
        // Predicated region
        $region53: #{tpu_custom_call.1} parent=15 // pred_check
          %p507 = pneg %p299
        $region54: #{tpu_custom_call.1} parent=15 // pred_check_branch
          %509 = sbr.rel (%p507) target = $region56
        $region55: #{tpu_custom_call.1} parent=15 // pred_region
          %p510 = scmp.lt.s32.totalorder %s38, 1
          %s511 = scalar_select %p510, %s38, 1
          %s512 = scalar_lea.vmem %s9, %s511
        $region56: #{tpu_custom_call.1} parent=15 // pred_fallthru
          _
      $region16: #{tpu_custom_call.1} parent=5 // pred_fallthru
        _
      %p513 = scmp.le.s32.totalorder 1, %s31
      %p514 = scmp.lt.s32.totalorder %s31, 15
      %p515 = pnand %p513, %p514
      %p516 = pneg %p515
      // Predicated region
      $region57: #{tpu_custom_call.1} parent=5 // pred_check
        _
      $region58: #{tpu_custom_call.1} parent=5 // pred_check_branch
        %518 = sbr.rel (%p515) target = $region60
      $region59: #{tpu_custom_call.1} parent=5 // pred_region
        %s519 = ssub.s32 %s31, 1
        %s520 = sand.u32 %s58, 1
        %s521 = scalar_lea.sflag [#allocation7], %s520
        %s522 = sand.u32 %s58, 1
        %s523 = smul.addr %s522, 4
        %s524 = scalar_lea.vmem [#allocation6], %s523
        // Predicated region
        $region61: #{tpu_custom_call.1} parent=59 // pred_check
          %p525 = pneg %p71
        $region62: #{tpu_custom_call.1} parent=59 // pred_check_branch
          %527 = sbr.rel (%p525) target = $region64
        $region63: #{tpu_custom_call.1} parent=59 // pred_region
          %528 = dma.done %s521, 64
        $region64: #{tpu_custom_call.1} parent=59 // pred_fallthru
          _
        %s529 = sand.u32 %s36, 1
        %s530 = scalar_lea.sflag [#allocation10], %s529
        %s531 = sand.u32 %s84, 1
        %s532 = smul.addr %s531, 4
        %s533 = scalar_lea.vmem [#allocation9], %s532
        // Predicated region
        $region65: #{tpu_custom_call.1} parent=59 // pred_check
          %p534 = pneg %p97
        $region66: #{tpu_custom_call.1} parent=59 // pred_check_branch
          %536 = sbr.rel (%p534) target = $region68
        $region67: #{tpu_custom_call.1} parent=59 // pred_region
          %537 = dma.done %s530, 64
        $region68: #{tpu_custom_call.1} parent=59 // pred_fallthru
          _
        %s538 = sand.u32 %s36, 1
        %s539 = scalar_lea.sflag [#allocation10], %s538
        %s540 = sand.u32 %s110, 1
        %s541 = smul.addr %s540, 32
        %s542 = scalar_lea.vmem [#allocation11], %s541
        // Predicated region
        $region69: #{tpu_custom_call.1} parent=59 // pred_check
          %p543 = pneg %p123
        $region70: #{tpu_custom_call.1} parent=59 // pred_check_branch
          %545 = sbr.rel (%p543) target = $region72
        $region71: #{tpu_custom_call.1} parent=59 // pred_region
          %546 = dma.done %s539, 512
        $region72: #{tpu_custom_call.1} parent=59 // pred_fallthru
          _
        %s547 = sand.u32 %s36, 1
        %s548 = scalar_lea.sflag [#allocation13], %s547
        %s549 = sand.u32 %s136, 1
        %s550 = smul.addr %s549, 32
        %s551 = scalar_lea.vmem [#allocation12], %s550
        // Predicated region
        $region73: #{tpu_custom_call.1} parent=59 // pred_check
          %p552 = pneg %p149
        $region74: #{tpu_custom_call.1} parent=59 // pred_check_branch
          %554 = sbr.rel (%p552) target = $region76
        $region75: #{tpu_custom_call.1} parent=59 // pred_region
          %555 = dma.done %s548, 512
        $region76: #{tpu_custom_call.1} parent=59 // pred_fallthru
          _
        %s556 = sand.u32 %s36, 1
        %s557 = scalar_lea.sflag [#allocation13], %s556
        %s558 = sand.u32 %s188, 1
        %s559 = smul.addr %s558, 32
        %s560 = scalar_lea.vmem [#allocation14], %s559
        // Predicated region
        $region77: #{tpu_custom_call.1} parent=59 // pred_check
          %p561 = pneg %p201
        $region78: #{tpu_custom_call.1} parent=59 // pred_check_branch
          %563 = sbr.rel (%p561) target = $region80
        $region79: #{tpu_custom_call.1} parent=59 // pred_region
          %564 = dma.done %s557, 512
        $region80: #{tpu_custom_call.1} parent=59 // pred_fallthru
          _
        %s565 = sand.u32 %s36, 1
        %s566 = scalar_lea.sflag [#allocation16], %s565
        %s567 = sand.u32 %s240, 1
        %s568 = smul.addr %s567, 96
        %s569 = scalar_lea.vmem [#allocation15], %s568
        // Predicated region
        $region81: #{tpu_custom_call.1} parent=59 // pred_check
          %p570 = pneg %p253
        $region82: #{tpu_custom_call.1} parent=59 // pred_check_branch
          %572 = sbr.rel (%p570) target = $region84
        $region83: #{tpu_custom_call.1} parent=59 // pred_region
          %573 = dma.done %s566, 1536
        $region84: #{tpu_custom_call.1} parent=59 // pred_fallthru
          _
        %s574 = sand.u32 %s36, 1
        %s575 = scalar_lea.sflag [#allocation16], %s574
        %s576 = sand.u32 %s266, 1
        %s577 = smul.addr %s576, 32
        %s578 = scalar_lea.vmem [#allocation17], %s577
        // Predicated region
        $region85: #{tpu_custom_call.1} parent=59 // pred_check
          %p579 = pneg %p279
        $region86: #{tpu_custom_call.1} parent=59 // pred_check_branch
          %581 = sbr.rel (%p579) target = $region88
        $region87: #{tpu_custom_call.1} parent=59 // pred_region
          %582 = dma.done %s575, 512
        $region88: #{tpu_custom_call.1} parent=59 // pred_fallthru
          _
        %s583 = sand.u32 %s58, 1
        %s584 = scalar_lea.sflag [#allocation7], %s583
        %s585 = sand.u32 %s58, 1
        %s586 = smul.addr %s585, 4
        %s587 = scalar_lea.vmem [#allocation6], %s586
        %p588 = pneg %p71
        %p589 = pneg %p68
        %s590 = sand.u32 %s36, 1
        %s591 = scalar_lea.sflag [#allocation10], %s590
        %s592 = sand.u32 %s84, 1
        %s593 = smul.addr %s592, 4
        %s594 = scalar_lea.vmem [#allocation9], %s593
        %p595 = pneg %p97
        %p596 = pneg %p94
        %s597 = sand.u32 %s36, 1
        %s598 = scalar_lea.sflag [#allocation10], %s597
        %s599 = sand.u32 %s110, 1
        %s600 = smul.addr %s599, 32
        %s601 = scalar_lea.vmem [#allocation11], %s600
        %p602 = pneg %p123
        %p603 = pneg %p120
        %s604 = sand.u32 %s36, 1
        %s605 = scalar_lea.sflag [#allocation13], %s604
        %s606 = sand.u32 %s136, 1
        %s607 = smul.addr %s606, 32
        %s608 = scalar_lea.vmem [#allocation12], %s607
        %p609 = pneg %p149
        %p610 = pneg %p146
        %p611 = scmp.lt.s32.totalorder %s40, 1
        %s612 = scalar_select %p611, %s40, 1
        %s613 = scalar_lea.vmem %s4, %s612
        %p614 = pneg %p175
        %p615 = pneg %p172
        %s616 = sand.u32 %s36, 1
        %s617 = scalar_lea.sflag [#allocation13], %s616
        %s618 = sand.u32 %s188, 1
        %s619 = smul.addr %s618, 32
        %s620 = scalar_lea.vmem [#allocation14], %s619
        %p621 = pneg %p201
        %p622 = pneg %p198
        %p623 = scmp.lt.s32.totalorder %s40, 1
        %s624 = scalar_select %p623, %s40, 1
        %s625 = scalar_lea.vmem %s6, %s624
        %p626 = pneg %p227
        %p627 = pneg %p224
        %s628 = sand.u32 %s36, 1
        %s629 = scalar_lea.sflag [#allocation16], %s628
        %s630 = sand.u32 %s240, 1
        %s631 = smul.addr %s630, 96
        %s632 = scalar_lea.vmem [#allocation15], %s631
        %p633 = pneg %p253
        %p634 = pneg %p250
        %s635 = sand.u32 %s36, 1
        %s636 = scalar_lea.sflag [#allocation16], %s635
        %s637 = sand.u32 %s266, 1
        %s638 = smul.addr %s637, 32
        %s639 = scalar_lea.vmem [#allocation17], %s638
        %p640 = pneg %p279
        %p641 = pneg %p276
        %p642 = scmp.lt.s32.totalorder %s40, 1
        %s643 = scalar_select %p642, %s40, 1
        %s644 = scalar_lea.vmem %s9, %s643
        %p645 = pneg %p305
        %p646 = pneg %p302
        %p647 = pneg %p333
        %p648 = pneg %p330
        %s649 = sand.u32 %s320, 1
        %s650 = scalar_lea.sflag [#allocation8], %s649
        %s651 = sand.u32 %s320, 1
        %s652 = smul.addr %s651, 4
        %s653 = scalar_lea.vmem [#allocation18], %s652
        %p654 = scmp.lt.s32.totalorder %s40, 1
        %s655 = scalar_select %p654, %s40, 1
        %s656 = scalar_lea.vmem %s4, %s655
        %p657 = scmp.lt.s32.totalorder %s40, 1
        %s658 = scalar_select %p657, %s40, 1
        %s659 = scalar_lea.vmem %s6, %s658
        %p660 = scmp.lt.s32.totalorder %s40, 1
        %s661 = scalar_select %p660, %s40, 1
        %s662 = scalar_lea.vmem %s9, %s661
        %p663 = scmp.eq.s32.totalorder %s41, 0
        // Predicated region
        $region89: #{tpu_custom_call.1} parent=59 // pred_check
          %p664 = pneg %p663
        $region90: #{tpu_custom_call.1} parent=59 // pred_check_branch
          %666 = sbr.rel (%p664) target = $region92
        $region91: #{tpu_custom_call.1} parent=59 // pred_region
          %vm667 = vcmask 257024
          %668 = vst.msk [vmem:[#allocation2] sm:$0xf] %vm667, 0.0
          %669 = vst.msk [vmem:[#allocation3] sm:$0xf] %vm667, 0.0
          %670 = vst.msk [vmem:[#allocation4] sm:$0xf] %vm667, 0.0
          %671 = vst.msk [vmem:[#allocation5] sm:$0xf] %vm667, 0.0
        $region92: #{tpu_custom_call.1} parent=59 // pred_fallthru
          _
        %v672 = vld [vmem:[%s524] sm:$0xf]
        %v673 = vld [vmem:[%s533] sm:$0xf]
        %v674 = vld [vmem:[%s542] sm:$0xff]
        %v675 = vld [vmem:[%s542 + $0x8] sm:$0xff]
        %v676 = vld [vmem:[%s542 + $0x10] sm:$0xff]
        %v677 = vld [vmem:[%s542 + $0x18] sm:$0xff]
        %v678 = vld [vmem:[#allocation2] sm:$0xf]
        %v679 = vld [vmem:[%s551] sm:$0xff]
        %v680 = vld [vmem:[%s551 + $0x8] sm:$0xff]
        %v681 = vld [vmem:[%s551 + $0x10] sm:$0xff]
        %v682 = vld [vmem:[%s551 + $0x18] sm:$0xff]
        %vm683 = vcmask 261120
        %v685 = vsel %vm683, %v678, 0
        %687 = vmatprep.subr.mxu0 0.0
        %688 = vmatpush1.msra.mxu0 %v679
        %689 = vmatprep.subr.mxu0 0.0
        %690 = vmatpush1.msra.mxu0 %v680
        %691 = vmatprep.subr.mxu0 0.0
        %692 = vmatpush1.msra.mxu0 %v681
        %693 = vmatprep.subr.mxu0 0.0
        %694 = vmatpush1.msra.mxu0 %v682
        %695 = vmatprep.subr.mxu0 0.0
        %696 = vmatpush1.msra.mxu0 0.0
        %697 = vmatprep.subr.mxu0 0.0
        %698 = vmatpush1.msra.mxu0 0.0
        %699 = vmatprep.subr.mxu0 0.0
        %700 = vmatpush1.msra.mxu0 0.0
        %701 = vmatprep.subr.mxu0 0.0
        %702 = vmatpush1.msra.mxu0 0.0
        %703 = vmatprep.subr.mxu0 0.0
        %704 = vmatpush1.msra.mxu0 0.0
        %705 = vmatprep.subr.mxu0 0.0
        %706 = vmatpush1.msra.mxu0 0.0
        %707 = vmatprep.subr.mxu0 0.0
        %708 = vmatpush1.msra.mxu0 0.0
        %709 = vmatprep.subr.mxu0 0.0
        %710 = vmatpush1.msra.mxu0 0.0
        %711 = vmatprep.subr.mxu0 0.0
        %712 = vmatpush1.msra.mxu0 0.0
        %713 = vmatprep.subr.mxu0 0.0
        %714 = vmatpush1.msra.mxu0 0.0
        %715 = vmatprep.subr.mxu0 0.0
        %716 = vmatpush1.msra.mxu0 0.0
        %717 = vmatprep.subr.mxu0 0.0
        %718 = vmatpush1.msra.mxu0 0.0
        %719 = vmatprep.subr.mxu0 0.0
        %720 = vmatpush1.msra.mxu0 0.0
        %721 = vmatprep.subr.mxu0 0.0
        %722 = vmatpush1.msra.mxu0 0.0
        %723 = vmatprep.subr.mxu0 0.0
        %724 = vmatpush1.msra.mxu0 0.0
        %725 = vmatprep.subr.mxu0 0.0
        %726 = vmatpush1.msra.mxu0 0.0
        %727 = vmatprep.subr.mxu0 0.0
        %728 = vmatpush1.msra.mxu0 0.0
        %729 = vmatprep.subr.mxu0 0.0
        %730 = vmatpush1.msra.mxu0 0.0
        %731 = vmatprep.subr.mxu0 0.0
        %732 = vmatpush1.msra.mxu0 0.0
        %733 = vmatprep.subr.mxu0 0.0
        %734 = vmatpush1.msra.mxu0 0.0
        %735 = vmatprep.subr.mxu0 0.0
        %736 = vmatpush1.msra.mxu0 0.0
        %737 = vmatprep.subr.mxu0 0.0
        %738 = vmatpush1.msra.mxu0 0.0
        %739 = vmatprep.subr.mxu0 0.0
        %740 = vmatpush1.msra.mxu0 0.0
        %741 = vmatprep.subr.mxu0 0.0
        %742 = vmatpush1.msra.mxu0 0.0
        %743 = vmatprep.subr.mxu0 0.0
        %744 = vmatpush1.msra.mxu0 0.0
        %745 = vmatprep.subr.mxu0 0.0
        %746 = vmatpush1.msra.mxu0 0.0
        %747 = vmatprep.subr.mxu0 0.0
        %748 = vmatpush1.msra.mxu0 0.0
        %749 = vmatprep.subr.mxu0 0.0
        %750 = vmatpush1.msra.mxu0 0.0
        %751 = vmatprep.mubr.f32.mxu0 0.0
        %752 = vmatmul.mubr.f32.gmra.mrb[0].mxu0 %v685
        %v753 = vpop.f32.mrb[0].mxu0
        %v754 = vadd.f32 0.0, %v753
        %v755 = vpop.f32.mrb[0].mxu0
        %756 = vdwg.mxu0
        %v758 = vsel %vm683, %v672, 0
        %760 = vmatprep.subr.mxu0 0.0
        %761 = vmatpush1.msra.mxu0 %v674
        %762 = vmatprep.subr.mxu0 0.0
        %763 = vmatpush1.msra.mxu0 %v675
        %764 = vmatprep.subr.mxu0 0.0
        %765 = vmatpush1.msra.mxu0 %v676
        %766 = vmatprep.subr.mxu0 0.0
        %767 = vmatpush1.msra.mxu0 %v677
        %768 = vmatprep.subr.mxu0 0.0
        %769 = vmatpush1.msra.mxu0 0.0
        %770 = vmatprep.subr.mxu0 0.0
        %771 = vmatpush1.msra.mxu0 0.0
        %772 = vmatprep.subr.mxu0 0.0
        %773 = vmatpush1.msra.mxu0 0.0
        %774 = vmatprep.subr.mxu0 0.0
        %775 = vmatpush1.msra.mxu0 0.0
        %776 = vmatprep.subr.mxu0 0.0
        %777 = vmatpush1.msra.mxu0 0.0
        %778 = vmatprep.subr.mxu0 0.0
        %779 = vmatpush1.msra.mxu0 0.0
        %780 = vmatprep.subr.mxu0 0.0
        %781 = vmatpush1.msra.mxu0 0.0
        %782 = vmatprep.subr.mxu0 0.0
        %783 = vmatpush1.msra.mxu0 0.0
        %784 = vmatprep.subr.mxu0 0.0
        %785 = vmatpush1.msra.mxu0 0.0
        %786 = vmatprep.subr.mxu0 0.0
        %787 = vmatpush1.msra.mxu0 0.0
        %788 = vmatprep.subr.mxu0 0.0
        %789 = vmatpush1.msra.mxu0 0.0
        %790 = vmatprep.subr.mxu0 0.0
        %791 = vmatpush1.msra.mxu0 0.0
        %792 = vmatprep.subr.mxu0 0.0
        %793 = vmatpush1.msra.mxu0 0.0
        %794 = vmatprep.subr.mxu0 0.0
        %795 = vmatpush1.msra.mxu0 0.0
        %796 = vmatprep.subr.mxu0 0.0
        %797 = vmatpush1.msra.mxu0 0.0
        %798 = vmatprep.subr.mxu0 0.0
        %799 = vmatpush1.msra.mxu0 0.0
        %800 = vmatprep.subr.mxu0 0.0
        %801 = vmatpush1.msra.mxu0 0.0
        %802 = vmatprep.subr.mxu0 0.0
        %803 = vmatpush1.msra.mxu0 0.0
        %804 = vmatprep.subr.mxu0 0.0
        %805 = vmatpush1.msra.mxu0 0.0
        %806 = vmatprep.subr.mxu0 0.0
        %807 = vmatpush1.msra.mxu0 0.0
        %808 = vmatprep.subr.mxu0 0.0
        %809 = vmatpush1.msra.mxu0 0.0
        %810 = vmatprep.subr.mxu0 0.0
        %811 = vmatpush1.msra.mxu0 0.0
        %812 = vmatprep.subr.mxu0 0.0
        %813 = vmatpush1.msra.mxu0 0.0
        %814 = vmatprep.subr.mxu0 0.0
        %815 = vmatpush1.msra.mxu0 0.0
        %816 = vmatprep.subr.mxu0 0.0
        %817 = vmatpush1.msra.mxu0 0.0
        %818 = vmatprep.subr.mxu0 0.0
        %819 = vmatpush1.msra.mxu0 0.0
        %820 = vmatprep.subr.mxu0 0.0
        %821 = vmatpush1.msra.mxu0 0.0
        %822 = vmatprep.subr.mxu0 0.0
        %823 = vmatpush1.msra.mxu0 0.0
        %824 = vmatprep.mubr.f32.mxu0 0.0
        %825 = vmatmul.mubr.f32.gmra.mrb[0].mxu0 %v758
        %v826 = vpop.f32.mrb[0].mxu0
        %v827 = vadd.f32 %v754, %v826
        %v828 = vpop.f32.mrb[0].mxu0
        %829 = vdwg.mxu0
        %v830 = vld [vmem:[%s656] sm:$0x1]
        %v832 = vlaneseq
        %v833 = vshrl.u32 %v832, 7
        %v834 = vsub.s32 0, %v833
        %v835 = vrot.slane %v830, %v834
        %v837 = vadd.f32 %v827, %v835
        %v838 = vld [vmem:[#allocation3] sm:$0xf]
        %v839 = vxor.u32 %v837, 2147483648
        %v840 = vmul.f32 %v839, 1.442695
        %v841 = vpow.pop %v840
        %v842 = vadd.f32 %v841, 1.0
        %v843 = vrcp.pop %v842
        %v844 = vmul.f32 1.0, %v843
        %v845 = vtanh.pop %v837
        %847 = vrot.lane.b32.xlu0 %v838, 32
        %v848 = vpop.permute.xlu0 %847
        %v850 = vmul.f32 %v844, %v848
        %852 = vrot.lane.b32.xlu0 %v845, 64
        %v853 = vpop.permute.xlu0 %852
        %v855 = vmul.f32 %v844, %v853
        %857 = vrot.lane.b32.xlu0 %v855, 32
        %v858 = vpop.permute.xlu0 %857
        %v860 = vadd.f32 %v850, %v858
        %v861 = vtanh.pop %v860
        %863 = vrot.lane.b32.xlu0 %v861, 64
        %v864 = vpop.permute.xlu0 %863
        %v866 = vmul.f32 %v844, %v864
        %868 = vrot.lane.b32.xlu0 %v866, 32
        %v869 = vpop.permute.xlu0 %868
        %vm871 = vcmask 257024
        %872 = vst.msk [vmem:[#allocation2] sm:$0xf] %vm871, %v869
        %874 = vrot.lane.b32.xlu0 %v860, 96
        %v875 = vpop.permute.xlu0 %874
        %877 = vst.msk [vmem:[#allocation3] sm:$0xf] %vm871, %v875
        %v878 = vld [vmem:[%s560] sm:$0xff]
        %v879 = vld [vmem:[%s560 + $0x8] sm:$0xff]
        %v880 = vld [vmem:[%s560 + $0x10] sm:$0xff]
        %v881 = vld [vmem:[%s560 + $0x18] sm:$0xff]
        %v882 = vld [vmem:[%s659] sm:$0x1]
        %v884 = vlaneseq
        %v885 = vshrl.u32 %v884, 7
        %v886 = vsub.s32 0, %v885
        %v887 = vrot.slane %v882, %v886
        %v889 = vsel %vm683, %v869, 0
        %891 = vmatprep.subr.mxu0 0.0
        %892 = vmatpush1.msra.mxu0 %v878
        %893 = vmatprep.subr.mxu0 0.0
        %894 = vmatpush1.msra.mxu0 %v879
        %895 = vmatprep.subr.mxu0 0.0
        %896 = vmatpush1.msra.mxu0 %v880
        %897 = vmatprep.subr.mxu0 0.0
        %898 = vmatpush1.msra.mxu0 %v881
        %899 = vmatprep.subr.mxu0 0.0
        %900 = vmatpush1.msra.mxu0 0.0
        %901 = vmatprep.subr.mxu0 0.0
        %902 = vmatpush1.msra.mxu0 0.0
        %903 = vmatprep.subr.mxu0 0.0
        %904 = vmatpush1.msra.mxu0 0.0
        %905 = vmatprep.subr.mxu0 0.0
        %906 = vmatpush1.msra.mxu0 0.0
        %907 = vmatprep.subr.mxu0 0.0
        %908 = vmatpush1.msra.mxu0 0.0
        %909 = vmatprep.subr.mxu0 0.0
        %910 = vmatpush1.msra.mxu0 0.0
        %911 = vmatprep.subr.mxu0 0.0
        %912 = vmatpush1.msra.mxu0 0.0
        %913 = vmatprep.subr.mxu0 0.0
        %914 = vmatpush1.msra.mxu0 0.0
        %915 = vmatprep.subr.mxu0 0.0
        %916 = vmatpush1.msra.mxu0 0.0
        %917 = vmatprep.subr.mxu0 0.0
        %918 = vmatpush1.msra.mxu0 0.0
        %919 = vmatprep.subr.mxu0 0.0
        %920 = vmatpush1.msra.mxu0 0.0
        %921 = vmatprep.subr.mxu0 0.0
        %922 = vmatpush1.msra.mxu0 0.0
        %923 = vmatprep.subr.mxu0 0.0
        %924 = vmatpush1.msra.mxu0 0.0
        %925 = vmatprep.subr.mxu0 0.0
        %926 = vmatpush1.msra.mxu0 0.0
        %927 = vmatprep.subr.mxu0 0.0
        %928 = vmatpush1.msra.mxu0 0.0
        %929 = vmatprep.subr.mxu0 0.0
        %930 = vmatpush1.msra.mxu0 0.0
        %931 = vmatprep.subr.mxu0 0.0
        %932 = vmatpush1.msra.mxu0 0.0
        %933 = vmatprep.subr.mxu0 0.0
        %934 = vmatpush1.msra.mxu0 0.0
        %935 = vmatprep.subr.mxu0 0.0
        %936 = vmatpush1.msra.mxu0 0.0
        %937 = vmatprep.subr.mxu0 0.0
        %938 = vmatpush1.msra.mxu0 0.0
        %939 = vmatprep.subr.mxu0 0.0
        %940 = vmatpush1.msra.mxu0 0.0
        %941 = vmatprep.subr.mxu0 0.0
        %942 = vmatpush1.msra.mxu0 0.0
        %943 = vmatprep.subr.mxu0 0.0
        %944 = vmatpush1.msra.mxu0 0.0
        %945 = vmatprep.subr.mxu0 0.0
        %946 = vmatpush1.msra.mxu0 0.0
        %947 = vmatprep.subr.mxu0 0.0
        %948 = vmatpush1.msra.mxu0 0.0
        %949 = vmatprep.subr.mxu0 0.0
        %950 = vmatpush1.msra.mxu0 0.0
        %951 = vmatprep.subr.mxu0 0.0
        %952 = vmatpush1.msra.mxu0 0.0
        %953 = vmatprep.subr.mxu0 0.0
        %954 = vmatpush1.msra.mxu0 0.0
        %955 = vmatprep.mubr.f32.mxu0 0.0
        %956 = vmatmul.mubr.f32.gmra.mrb[0].mxu0 %v889
        %v957 = vpop.f32.mrb[0].mxu0
        %v958 = vadd.f32 %v887, %v957
        %v959 = vpop.f32.mrb[0].mxu0
        %960 = vdwg.mxu0
        %v961 = vld [vmem:[%s569] sm:$0xff]
        %v962 = vld [vmem:[%s569 + $0x8] sm:$0xff]
        %v963 = vld [vmem:[%s569 + $0x10] sm:$0xff]
        %v964 = vld [vmem:[%s569 + $0x18] sm:$0xff]
        %s965 = scalar_lea.vmem %s569, 32 [#allocation15]
        %v966 = vld [vmem:[%s965] sm:$0xff]
        %v967 = vld [vmem:[%s965 + $0x8] sm:$0xff]
        %v968 = vld [vmem:[%s965 + $0x10] sm:$0xff]
        %v969 = vld [vmem:[%s965 + $0x18] sm:$0xff]
        %v971 = vsel %vm683, %v958, 0
        %973 = vmatprep.subr.mxu0 0.0
        %974 = vmatpush1.msra.mxu0 %v966
        %975 = vmatprep.subr.mxu0 0.0
        %976 = vmatpush1.msra.mxu0 %v967
        %977 = vmatprep.subr.mxu0 0.0
        %978 = vmatpush1.msra.mxu0 %v968
        %979 = vmatprep.subr.mxu0 0.0
        %980 = vmatpush1.msra.mxu0 %v969
        %981 = vmatprep.subr.mxu0 0.0
        %982 = vmatpush1.msra.mxu0 0.0
        %983 = vmatprep.subr.mxu0 0.0
        %984 = vmatpush1.msra.mxu0 0.0
        %985 = vmatprep.subr.mxu0 0.0
        %986 = vmatpush1.msra.mxu0 0.0
        %987 = vmatprep.subr.mxu0 0.0
        %988 = vmatpush1.msra.mxu0 0.0
        %989 = vmatprep.subr.mxu0 0.0
        %990 = vmatpush1.msra.mxu0 0.0
        %991 = vmatprep.subr.mxu0 0.0
        %992 = vmatpush1.msra.mxu0 0.0
        %993 = vmatprep.subr.mxu0 0.0
        %994 = vmatpush1.msra.mxu0 0.0
        %995 = vmatprep.subr.mxu0 0.0
        %996 = vmatpush1.msra.mxu0 0.0
        %997 = vmatprep.subr.mxu0 0.0
        %998 = vmatpush1.msra.mxu0 0.0
        %999 = vmatprep.subr.mxu0 0.0
        %1000 = vmatpush1.msra.mxu0 0.0
        %1001 = vmatprep.subr.mxu0 0.0
        %1002 = vmatpush1.msra.mxu0 0.0
        %1003 = vmatprep.subr.mxu0 0.0
        %1004 = vmatpush1.msra.mxu0 0.0
        %1005 = vmatprep.subr.mxu0 0.0
        %1006 = vmatpush1.msra.mxu0 0.0
        %1007 = vmatprep.subr.mxu0 0.0
        %1008 = vmatpush1.msra.mxu0 0.0
        %1009 = vmatprep.subr.mxu0 0.0
        %1010 = vmatpush1.msra.mxu0 0.0
        %1011 = vmatprep.subr.mxu0 0.0
        %1012 = vmatpush1.msra.mxu0 0.0
        %1013 = vmatprep.subr.mxu0 0.0
        %1014 = vmatpush1.msra.mxu0 0.0
        %1015 = vmatprep.subr.mxu0 0.0
        %1016 = vmatpush1.msra.mxu0 0.0
        %1017 = vmatprep.subr.mxu0 0.0
        %1018 = vmatpush1.msra.mxu0 0.0
        %1019 = vmatprep.subr.mxu0 0.0
        %1020 = vmatpush1.msra.mxu0 0.0
        %1021 = vmatprep.subr.mxu0 0.0
        %1022 = vmatpush1.msra.mxu0 0.0
        %1023 = vmatprep.subr.mxu0 0.0
        %1024 = vmatpush1.msra.mxu0 0.0
        %1025 = vmatprep.subr.mxu0 0.0
        %1026 = vmatpush1.msra.mxu0 0.0
        %1027 = vmatprep.subr.mxu0 0.0
        %1028 = vmatpush1.msra.mxu0 0.0
        %1029 = vmatprep.subr.mxu0 0.0
        %1030 = vmatpush1.msra.mxu0 0.0
        %1031 = vmatprep.subr.mxu0 0.0
        %1032 = vmatpush1.msra.mxu0 0.0
        %1033 = vmatprep.subr.mxu0 0.0
        %1034 = vmatpush1.msra.mxu0 0.0
        %1035 = vmatprep.subr.mxu0 0.0
        %1036 = vmatpush1.msra.mxu0 0.0
        %1037 = vmatprep.mubr.f32.mxu0 0.0
        %1038 = vmatmul.mubr.f32.gmra.mrb[0].mxu0 %v971
        %v1039 = vpop.f32.mrb[0].mxu0
        %v1040 = vadd.f32 0.0, %v1039
        %v1041 = vpop.f32.mrb[0].mxu0
        %1042 = vdwg.mxu0
        %1043 = vmatprep.subr.mxu0 0.0
        %1044 = vmatpush1.msra.mxu0 %v961
        %1045 = vmatprep.subr.mxu0 0.0
        %1046 = vmatpush1.msra.mxu0 %v962
        %1047 = vmatprep.subr.mxu0 0.0
        %1048 = vmatpush1.msra.mxu0 %v963
        %1049 = vmatprep.subr.mxu0 0.0
        %1050 = vmatpush1.msra.mxu0 %v964
        %1051 = vmatprep.subr.mxu0 0.0
        %1052 = vmatpush1.msra.mxu0 0.0
        %1053 = vmatprep.subr.mxu0 0.0
        %1054 = vmatpush1.msra.mxu0 0.0
        %1055 = vmatprep.subr.mxu0 0.0
        %1056 = vmatpush1.msra.mxu0 0.0
        %1057 = vmatprep.subr.mxu0 0.0
        %1058 = vmatpush1.msra.mxu0 0.0
        %1059 = vmatprep.subr.mxu0 0.0
        %1060 = vmatpush1.msra.mxu0 0.0
        %1061 = vmatprep.subr.mxu0 0.0
        %1062 = vmatpush1.msra.mxu0 0.0
        %1063 = vmatprep.subr.mxu0 0.0
        %1064 = vmatpush1.msra.mxu0 0.0
        %1065 = vmatprep.subr.mxu0 0.0
        %1066 = vmatpush1.msra.mxu0 0.0
        %1067 = vmatprep.subr.mxu0 0.0
        %1068 = vmatpush1.msra.mxu0 0.0
        %1069 = vmatprep.subr.mxu0 0.0
        %1070 = vmatpush1.msra.mxu0 0.0
        %1071 = vmatprep.subr.mxu0 0.0
        %1072 = vmatpush1.msra.mxu0 0.0
        %1073 = vmatprep.subr.mxu0 0.0
        %1074 = vmatpush1.msra.mxu0 0.0
        %1075 = vmatprep.subr.mxu0 0.0
        %1076 = vmatpush1.msra.mxu0 0.0
        %1077 = vmatprep.subr.mxu0 0.0
        %1078 = vmatpush1.msra.mxu0 0.0
        %1079 = vmatprep.subr.mxu0 0.0
        %1080 = vmatpush1.msra.mxu0 0.0
        %1081 = vmatprep.subr.mxu0 0.0
        %1082 = vmatpush1.msra.mxu0 0.0
        %1083 = vmatprep.subr.mxu0 0.0
        %1084 = vmatpush1.msra.mxu0 0.0
        %1085 = vmatprep.subr.mxu0 0.0
        %1086 = vmatpush1.msra.mxu0 0.0
        %1087 = vmatprep.subr.mxu0 0.0
        %1088 = vmatpush1.msra.mxu0 0.0
        %1089 = vmatprep.subr.mxu0 0.0
        %1090 = vmatpush1.msra.mxu0 0.0
        %1091 = vmatprep.subr.mxu0 0.0
        %1092 = vmatpush1.msra.mxu0 0.0
        %1093 = vmatprep.subr.mxu0 0.0
        %1094 = vmatpush1.msra.mxu0 0.0
        %1095 = vmatprep.subr.mxu0 0.0
        %1096 = vmatpush1.msra.mxu0 0.0
        %1097 = vmatprep.subr.mxu0 0.0
        %1098 = vmatpush1.msra.mxu0 0.0
        %1099 = vmatprep.subr.mxu0 0.0
        %1100 = vmatpush1.msra.mxu0 0.0
        %1101 = vmatprep.subr.mxu0 0.0
        %1102 = vmatpush1.msra.mxu0 0.0
        %1103 = vmatprep.subr.mxu0 0.0
        %1104 = vmatpush1.msra.mxu0 0.0
        %1105 = vmatprep.subr.mxu0 0.0
        %1106 = vmatpush1.msra.mxu0 0.0
        %1107 = vmatprep.mubr.f32.mxu0 0.0
        %1108 = vmatmul.mubr.f32.gmra.mrb[0].mxu0 %v889
        %v1109 = vpop.f32.mrb[0].mxu0
        %v1110 = vadd.f32 %v1040, %v1109
        %v1111 = vpop.f32.mrb[0].mxu0
        %1112 = vdwg.mxu0
        %s1113 = scalar_lea.vmem %s569, 64 [#allocation15]
        %v1114 = vld [vmem:[%s1113] sm:$0xff]
        %v1115 = vld [vmem:[%s1113 + $0x8] sm:$0xff]
        %v1116 = vld [vmem:[%s1113 + $0x10] sm:$0xff]
        %v1117 = vld [vmem:[%s1113 + $0x18] sm:$0xff]
        %v1119 = vsel %vm683, %v673, 0
        %1121 = vmatprep.subr.mxu0 0.0
        %1122 = vmatpush1.msra.mxu0 %v1114
        %1123 = vmatprep.subr.mxu0 0.0
        %1124 = vmatpush1.msra.mxu0 %v1115
        %1125 = vmatprep.subr.mxu0 0.0
        %1126 = vmatpush1.msra.mxu0 %v1116
        %1127 = vmatprep.subr.mxu0 0.0
        %1128 = vmatpush1.msra.mxu0 %v1117
        %1129 = vmatprep.subr.mxu0 0.0
        %1130 = vmatpush1.msra.mxu0 0.0
        %1131 = vmatprep.subr.mxu0 0.0
        %1132 = vmatpush1.msra.mxu0 0.0
        %1133 = vmatprep.subr.mxu0 0.0
        %1134 = vmatpush1.msra.mxu0 0.0
        %1135 = vmatprep.subr.mxu0 0.0
        %1136 = vmatpush1.msra.mxu0 0.0
        %1137 = vmatprep.subr.mxu0 0.0
        %1138 = vmatpush1.msra.mxu0 0.0
        %1139 = vmatprep.subr.mxu0 0.0
        %1140 = vmatpush1.msra.mxu0 0.0
        %1141 = vmatprep.subr.mxu0 0.0
        %1142 = vmatpush1.msra.mxu0 0.0
        %1143 = vmatprep.subr.mxu0 0.0
        %1144 = vmatpush1.msra.mxu0 0.0
        %1145 = vmatprep.subr.mxu0 0.0
        %1146 = vmatpush1.msra.mxu0 0.0
        %1147 = vmatprep.subr.mxu0 0.0
        %1148 = vmatpush1.msra.mxu0 0.0
        %1149 = vmatprep.subr.mxu0 0.0
        %1150 = vmatpush1.msra.mxu0 0.0
        %1151 = vmatprep.subr.mxu0 0.0
        %1152 = vmatpush1.msra.mxu0 0.0
        %1153 = vmatprep.subr.mxu0 0.0
        %1154 = vmatpush1.msra.mxu0 0.0
        %1155 = vmatprep.subr.mxu0 0.0
        %1156 = vmatpush1.msra.mxu0 0.0
        %1157 = vmatprep.subr.mxu0 0.0
        %1158 = vmatpush1.msra.mxu0 0.0
        %1159 = vmatprep.subr.mxu0 0.0
        %1160 = vmatpush1.msra.mxu0 0.0
        %1161 = vmatprep.subr.mxu0 0.0
        %1162 = vmatpush1.msra.mxu0 0.0
        %1163 = vmatprep.subr.mxu0 0.0
        %1164 = vmatpush1.msra.mxu0 0.0
        %1165 = vmatprep.subr.mxu0 0.0
        %1166 = vmatpush1.msra.mxu0 0.0
        %1167 = vmatprep.subr.mxu0 0.0
        %1168 = vmatpush1.msra.mxu0 0.0
        %1169 = vmatprep.subr.mxu0 0.0
        %1170 = vmatpush1.msra.mxu0 0.0
        %1171 = vmatprep.subr.mxu0 0.0
        %1172 = vmatpush1.msra.mxu0 0.0
        %1173 = vmatprep.subr.mxu0 0.0
        %1174 = vmatpush1.msra.mxu0 0.0
        %1175 = vmatprep.subr.mxu0 0.0
        %1176 = vmatpush1.msra.mxu0 0.0
        %1177 = vmatprep.subr.mxu0 0.0
        %1178 = vmatpush1.msra.mxu0 0.0
        %1179 = vmatprep.subr.mxu0 0.0
        %1180 = vmatpush1.msra.mxu0 0.0
        %1181 = vmatprep.subr.mxu0 0.0
        %1182 = vmatpush1.msra.mxu0 0.0
        %1183 = vmatprep.subr.mxu0 0.0
        %1184 = vmatpush1.msra.mxu0 0.0
        %1185 = vmatprep.mubr.f32.mxu0 0.0
        %1186 = vmatmul.mubr.f32.gmra.mrb[0].mxu0 %v1119
        %v1187 = vpop.f32.mrb[0].mxu0
        %v1188 = vadd.f32 0.0, %v1187
        %v1189 = vpop.f32.mrb[0].mxu0
        %1190 = vdwg.mxu0
        %v1191 = vadd.f32 %v1110, %v1188
        %v1192 = vld [vmem:[#allocation4] sm:$0xf]
        %v1193 = vld [vmem:[%s578] sm:$0xff]
        %v1194 = vld [vmem:[%s578 + $0x8] sm:$0xff]
        %v1195 = vld [vmem:[%s578 + $0x10] sm:$0xff]
        %v1196 = vld [vmem:[%s578 + $0x18] sm:$0xff]
        %v1198 = vsel %vm683, %v1192, 0
        %1200 = vmatprep.subr.mxu0 0.0
        %1201 = vmatpush1.msra.mxu0 %v1193
        %1202 = vmatprep.subr.mxu0 0.0
        %1203 = vmatpush1.msra.mxu0 %v1194
        %1204 = vmatprep.subr.mxu0 0.0
        %1205 = vmatpush1.msra.mxu0 %v1195
        %1206 = vmatprep.subr.mxu0 0.0
        %1207 = vmatpush1.msra.mxu0 %v1196
        %1208 = vmatprep.subr.mxu0 0.0
        %1209 = vmatpush1.msra.mxu0 0.0
        %1210 = vmatprep.subr.mxu0 0.0
        %1211 = vmatpush1.msra.mxu0 0.0
        %1212 = vmatprep.subr.mxu0 0.0
        %1213 = vmatpush1.msra.mxu0 0.0
        %1214 = vmatprep.subr.mxu0 0.0
        %1215 = vmatpush1.msra.mxu0 0.0
        %1216 = vmatprep.subr.mxu0 0.0
        %1217 = vmatpush1.msra.mxu0 0.0
        %1218 = vmatprep.subr.mxu0 0.0
        %1219 = vmatpush1.msra.mxu0 0.0
        %1220 = vmatprep.subr.mxu0 0.0
        %1221 = vmatpush1.msra.mxu0 0.0
        %1222 = vmatprep.subr.mxu0 0.0
        %1223 = vmatpush1.msra.mxu0 0.0
        %1224 = vmatprep.subr.mxu0 0.0
        %1225 = vmatpush1.msra.mxu0 0.0
        %1226 = vmatprep.subr.mxu0 0.0
        %1227 = vmatpush1.msra.mxu0 0.0
        %1228 = vmatprep.subr.mxu0 0.0
        %1229 = vmatpush1.msra.mxu0 0.0
        %1230 = vmatprep.subr.mxu0 0.0
        %1231 = vmatpush1.msra.mxu0 0.0
        %1232 = vmatprep.subr.mxu0 0.0
        %1233 = vmatpush1.msra.mxu0 0.0
        %1234 = vmatprep.subr.mxu0 0.0
        %1235 = vmatpush1.msra.mxu0 0.0
        %1236 = vmatprep.subr.mxu0 0.0
        %1237 = vmatpush1.msra.mxu0 0.0
        %1238 = vmatprep.subr.mxu0 0.0
        %1239 = vmatpush1.msra.mxu0 0.0
        %1240 = vmatprep.subr.mxu0 0.0
        %1241 = vmatpush1.msra.mxu0 0.0
        %1242 = vmatprep.subr.mxu0 0.0
        %1243 = vmatpush1.msra.mxu0 0.0
        %1244 = vmatprep.subr.mxu0 0.0
        %1245 = vmatpush1.msra.mxu0 0.0
        %1246 = vmatprep.subr.mxu0 0.0
        %1247 = vmatpush1.msra.mxu0 0.0
        %1248 = vmatprep.subr.mxu0 0.0
        %1249 = vmatpush1.msra.mxu0 0.0
        %1250 = vmatprep.subr.mxu0 0.0
        %1251 = vmatpush1.msra.mxu0 0.0
        %1252 = vmatprep.subr.mxu0 0.0
        %1253 = vmatpush1.msra.mxu0 0.0
        %1254 = vmatprep.subr.mxu0 0.0
        %1255 = vmatpush1.msra.mxu0 0.0
        %1256 = vmatprep.subr.mxu0 0.0
        %1257 = vmatpush1.msra.mxu0 0.0
        %1258 = vmatprep.subr.mxu0 0.0
        %1259 = vmatpush1.msra.mxu0 0.0
        %1260 = vmatprep.subr.mxu0 0.0
        %1261 = vmatpush1.msra.mxu0 0.0
        %1262 = vmatprep.subr.mxu0 0.0
        %1263 = vmatpush1.msra.mxu0 0.0
        %1264 = vmatprep.mubr.f32.mxu0 0.0
        %1265 = vmatmul.mubr.f32.gmra.mrb[0].mxu0 %v1198
        %v1266 = vpop.f32.mrb[0].mxu0
        %v1267 = vadd.f32 0.0, %v1266
        %v1268 = vpop.f32.mrb[0].mxu0
        %1269 = vdwg.mxu0
        %v1270 = vadd.f32 %v1191, %v1267
        %v1271 = vld [vmem:[%s662] sm:$0x1]
        %v1273 = vlaneseq
        %v1274 = vshrl.u32 %v1273, 7
        %v1275 = vsub.s32 0, %v1274
        %v1276 = vrot.slane %v1271, %v1275
        %v1278 = vadd.f32 %v1270, %v1276
        %v1279 = vld [vmem:[#allocation5] sm:$0xf]
        %v1280 = vxor.u32 %v1278, 2147483648
        %v1281 = vmul.f32 %v1280, 1.442695
        %v1282 = vpow.pop %v1281
        %v1283 = vadd.f32 %v1282, 1.0
        %v1284 = vrcp.pop %v1283
        %v1285 = vmul.f32 1.0, %v1284
        %v1286 = vtanh.pop %v1278
        %1288 = vrot.lane.b32.xlu0 %v1279, 32
        %v1289 = vpop.permute.xlu0 %1288
        %v1291 = vmul.f32 %v1285, %v1289
        %1293 = vrot.lane.b32.xlu0 %v1286, 64
        %v1294 = vpop.permute.xlu0 %1293
        %v1296 = vmul.f32 %v1285, %v1294
        %1298 = vrot.lane.b32.xlu0 %v1296, 32
        %v1299 = vpop.permute.xlu0 %1298
        %v1301 = vadd.f32 %v1291, %v1299
        %v1302 = vtanh.pop %v1301
        %1304 = vrot.lane.b32.xlu0 %v1302, 64
        %v1305 = vpop.permute.xlu0 %1304
        %v1307 = vmul.f32 %v1285, %v1305
        %1309 = vrot.lane.b32.xlu0 %v1307, 32
        %v1310 = vpop.permute.xlu0 %1309
        %1312 = vst.msk [vmem:[#allocation4] sm:$0xf] %vm871, %v1310
        %1314 = vrot.lane.b32.xlu0 %v1301, 96
        %v1315 = vpop.permute.xlu0 %1314
        %1317 = vst.msk [vmem:[#allocation5] sm:$0xf] %vm871, %v1315
        %1318 = vst.msk [vmem:[%s653] sm:$0xf] %vm871, %v1310
        %s1319 = sand.u32 %s320, 1
        %s1320 = scalar_lea.sflag [#allocation8], %s1319
        %s1321 = sand.u32 %s320, 1
        %s1322 = smul.addr %s1321, 4
        %s1323 = scalar_lea.vmem [#allocation18], %s1322
        // Predicated region
        $region93: #{tpu_custom_call.1} parent=59 // pred_check
          %p1324 = pneg %p330
        $region94: #{tpu_custom_call.1} parent=59 // pred_check_branch
          %1326 = sbr.rel (%p1324) target = $region96
        $region95: #{tpu_custom_call.1} parent=59 // pred_region
          %s1328 = ssub.s32 64, 64
          %1329 = vsyncadd %s1320, %s1328
          %s1330 = smul.addr %s40, 7
          %s1331 = sadd.s32 %s41, %s1330
          %s1332 = smul.addr %s1331, 64
          %s1333 = scalar_lea.hbm %s10, %s1332
          %s1335 = sshll.u32 %s1323, 4
          %s1336 = int_to_ptr.vmem [resolvable:$true] %s1335
          %1338 = dma.vmem_to_hbm [thread:$0]  %s1336, 64, %s1333, %s1320
        $region96: #{tpu_custom_call.1} parent=59 // pred_fallthru
          _
      $region60: #{tpu_custom_call.1} parent=5 // pred_fallthru
        _
      %p1339 = scmp.le.s32.totalorder 2, %s31
      // Predicated region
      $region97: #{tpu_custom_call.1} parent=5 // pred_check
        %p1340 = pneg %p1339
      $region98: #{tpu_custom_call.1} parent=5 // pred_check_branch
        %1342 = sbr.rel (%p1340) target = $region100
      $region99: #{tpu_custom_call.1} parent=5 // pred_region
        %s1343 = ssub.s32 %s31, 2
        // Predicated region
        $region101: #{tpu_custom_call.1} parent=99 // pred_check
          %p1344 = pneg %p336
        $region102: #{tpu_custom_call.1} parent=99 // pred_check_branch
          %1346 = sbr.rel (%p1344) target = $region104
        $region103: #{tpu_custom_call.1} parent=99 // pred_region
          %s1347 = sand.u32 %s321, 1
          %s1348 = scalar_lea.sflag [#allocation8], %s1347
          %s1349 = sand.u32 %s321, 1
          %s1350 = smul.addr %s1349, 4
          %s1351 = scalar_lea.vmem [#allocation18], %s1350
          %1352 = dma.done %s1348, 64
        $region104: #{tpu_custom_call.1} parent=99 // pred_fallthru
          _
      $region100: #{tpu_custom_call.1} parent=5 // pred_fallthru
        _
    $region6: #{tpu_custom_call.1} parent=1 // loop_footer
      %s35 = sadd.s32 1, %s31
    $region7: #{tpu_custom_call.1} parent=1 // loop_footer_branch
      %30 = sbr.rel target = $region3
    $region8: #{tpu_custom_call.1} parent=1 // loop_exit
      _
    %1353 = vsyncpa [#allocation7], 1
    %s1354 = scalar_lea.sflag [#allocation7], 1
    %1355 = vsyncpa %s1354, 1
    %1356 = vsyncpa [#allocation10], 1
    %s1357 = scalar_lea.sflag [#allocation10], 1
    %1358 = vsyncpa %s1357, 1
    %1359 = vsyncpa [#allocation13], 1
    %s1360 = scalar_lea.sflag [#allocation13], 1
    %1361 = vsyncpa %s1360, 1
    %1362 = vsyncpa [#allocation16], 1
    %s1363 = scalar_lea.sflag [#allocation16], 1
    %1364 = vsyncpa %s1363, 1
    %1365 = vsyncpa [#allocation8], 1
    %s1366 = scalar_lea.sflag [#allocation8], 1
    %1367 = vsyncpa %s1366, 1

</llo_original>
